<compile_context>
chip_gen: v7x
topology: tpu7x:2x2x1
jax: 0.10.0
libtpu: 0.0.40
codegen_flags: <defaults>
</compile_context>

<pallas_src>
import functools

import jax
import jax.numpy as jnp
from jax.experimental import pallas as pl
from jax.experimental.pallas import tpu as pltpu

_LANE = 128


# ----------------------------------------------------------------------------
# Tiling helpers
# ----------------------------------------------------------------------------
def _pad_lanes(x, multiple=_LANE):
    """Zero-pad the last (flattened-spatial) axis up to a multiple of 128 so
    every Pallas load/store is lane-dense (no masked vst)."""
    p = x.shape[-1]
    pad = (-p) % multiple
    if pad == 0:
        return x
    cfg = [(0, 0)] * (x.ndim - 1) + [(0, pad)]
    return jnp.pad(x, cfg)


def _choose_spatial_tile(p, target=16384):
    """Largest multiple of 128 that divides p and is <= target.

    target=16384: each grid step then moves ~1 MB, which amortizes the ~0.35us
    per-step overhead even at v7x HBM bandwidth, while the double-buffered
    working set stays at a few MiB (well inside VMEM on v5e/v6e/v7x)."""
    assert p % _LANE == 0, "pad the spatial axis to a multiple of 128 first"
    t = min(p, max(_LANE, (target // _LANE) * _LANE))
    while p % t != 0:
        t -= _LANE
    return t


# ----------------------------------------------------------------------------
# Pallas kernel 1: fused 1x1-conv heads for ALL models, channel-major.
#   cls[:, p_tile] = Wc_a @ xa_tile + Wc_b @ xb_tile + bc   (all M classifiers)
#   enc[:, p_tile] = We_a @ xa_tile + We_b @ xb_tile + be   (last model only)
# Pixels sit on the 128-lane axis; concat(xa, xb) is never materialized.
# The contraction is tiny (K=4, Cout<=~32) -> deliberately NOT MXU-tuned;
# the kernel is HBM-DMA bound.
# ----------------------------------------------------------------------------
def _fused_heads_kernel(xa_ref, xb_ref,
                        wca_ref, wcb_ref, bc_ref,
                        wea_ref, web_ref, be_ref,
                        logits_ref, enc_ref):
    xa = xa_ref[...]                                    # (Cin, p_tile)
    xb = xb_ref[...]
    cls = (jnp.dot(wca_ref[...], xa, preferred_element_type=jnp.float32)
           + jnp.dot(wcb_ref[...], xb, preferred_element_type=jnp.float32)
           + bc_ref[...])
    enc = (jnp.dot(wea_ref[...], xa, preferred_element_type=jnp.float32)
           + jnp.dot(web_ref[...], xb, preferred_element_type=jnp.float32)
           + be_ref[...])
    logits_ref[...] = cls.astype(logits_ref.dtype)
    enc_ref[...] = enc.astype(enc_ref.dtype)


def fused_heads_pallas(xa_flat, xb_flat,
                       w_cls_a, w_cls_b, b_cls,
                       w_enc_a, w_enc_b, b_enc, *, p_tile_target=16384):
    """xa_flat/xb_flat: (N, Cin, P) f32 with P a multiple of 128.
    Returns (logits_all (N, M*num_classes, P), enc_last (N, enc_ch, P))."""
    N, cin, P = xa_flat.shape
    mc = w_cls_a.shape[0]            # M * num_classes
    ec = w_enc_a.shape[0]            # enc_ch (last model only)
    p_tile = _choose_spatial_tile(P, p_tile_target)
    return pl.pallas_call(
        _fused_heads_kernel,
        out_shape=(jax.ShapeDtypeStruct((N, mc, P), jnp.float32),
                   jax.ShapeDtypeStruct((N, ec, P), jnp.float32)),
        grid=(N, P // p_tile),
        in_specs=[
            pl.BlockSpec((None, cin, p_tile), lambda n, p: (n, 0, p)),
            pl.BlockSpec((None, cin, p_tile), lambda n, p: (n, 0, p)),
            pl.BlockSpec((mc, cin), lambda n, p: (0, 0)),
            pl.BlockSpec((mc, cin), lambda n, p: (0, 0)),
            pl.BlockSpec((mc, 1), lambda n, p: (0, 0)),
            pl.BlockSpec((ec, cin), lambda n, p: (0, 0)),
            pl.BlockSpec((ec, cin), lambda n, p: (0, 0)),
            pl.BlockSpec((ec, 1), lambda n, p: (0, 0)),
        ],
        out_specs=(
            pl.BlockSpec((None, mc, p_tile), lambda n, p: (n, 0, p)),
            pl.BlockSpec((None, ec, p_tile), lambda n, p: (n, 0, p)),
        ),
        compiler_params=pltpu.CompilerParams(
            dimension_semantics=("parallel", "parallel")),
    )(xa_flat, xb_flat, w_cls_a, w_cls_b, b_cls, w_enc_a, w_enc_b, b_enc)


# ----------------------------------------------------------------------------
# Pallas kernel 2: fused ensemble softmax-accumulate-argmax.
# Single packed input (N, M*C, P): one DMA stream, M*C sublanes per load.
# Grid (N, P//p_tile), both parallel -> shards across both v7x TensorCores.
# ----------------------------------------------------------------------------
def _make_ensemble_kernel(num_models, num_classes, approx_recip):
    def kernel(logits_ref, pred_ref):
        x = logits_ref[...]                           # (M*C, p_tile) f32
        acc = None
        for m in range(num_models):                   # unrolled over models
            xm = x[m * num_classes:(m + 1) * num_classes, :]
            xmax = jnp.max(xm, axis=0, keepdims=True)
            e = jnp.exp(xm - xmax)
            denom = jnp.sum(e, axis=0, keepdims=True)
            # approx=True routes to the otherwise-idle EUP slot (prod option);
            # default False keeps cd_pred bit-identical to jax.nn.softmax.
            sm = e * pl.reciprocal(denom, approx=approx_recip)
            acc = sm if acc is None else acc + sm
        best_val = acc[0:1, :]                        # (1, p_tile)
        best_idx = jnp.zeros(best_val.shape, dtype=jnp.int32)
        # strict '>' keeps the first maximal index (torch argmax tie-breaking)
        for c in range(1, num_classes):
            v = acc[c:c + 1, :]
            take = v > best_val
            best_val = jnp.where(take, v, best_val)
            best_idx = jnp.where(take, jnp.int32(c), best_idx)
        pred_ref[...] = best_idx
    return kernel


def ensemble_softmax_argmax(logits_all, num_models, *, p_tile_target=16384,
                            approx_recip=False):
    """logits_all: (N, M*C, P) f32 (P multiple of 128) -> (N, P) int32."""
    N, mc, P = logits_all.shape
    num_classes = mc // num_models
    p_tile = _choose_spatial_tile(P, p_tile_target)
    kernel = _make_ensemble_kernel(num_models, num_classes, approx_recip)
    pred = pl.pallas_call(
        kernel,
        out_shape=jax.ShapeDtypeStruct((N, 1, P), jnp.int32),
        grid=(N, P // p_tile),
        in_specs=[pl.BlockSpec((None, mc, p_tile), lambda n, p: (n, 0, p))],
        out_specs=pl.BlockSpec((None, 1, p_tile), lambda n, p: (n, 0, p)),
        compiler_params=pltpu.CompilerParams(
            dimension_semantics=("parallel", "parallel")),
    )(logits_all)
    return pred.reshape(N, P)


# ----------------------------------------------------------------------------
# ScaleInOutput: bilinear align_corners=True resize as interpolation matmuls
# (runs on the MXU; replaces minor-dim gathers, which are slow on TPU).
# ----------------------------------------------------------------------------
def _interp_matrix(in_size, out_size):
    """(out_size, in_size) bilinear interpolation matrix (align_corners=True)."""
    if out_size > 1:
        pos = jnp.linspace(0.0, in_size - 1.0, out_size)
    else:
        pos = jnp.zeros((1,), jnp.float32)
    lo = jnp.clip(jnp.floor(pos).astype(jnp.int32), 0, in_size - 1)
    hi = jnp.clip(lo + 1, 0, in_size - 1)
    w = pos - lo.astype(pos.dtype)
    eye = jnp.eye(in_size, dtype=jnp.float32)
    return eye[lo] * (1.0 - w)[:, None] + eye[hi] * w[:, None]


def resize_bilinear_matmul(x, out_hw):
    """x: (N, C, H, W) -> (N, C, out_h, out_w); F.interpolate align_corners=True."""
    N, C, H, W = x.shape
    oh, ow = out_hw
    if (H, W) == (oh, ow):
        return x
    rh = _interp_matrix(H, oh)
    rw = _interp_matrix(W, ow)
    hp = jax.lax.Precision.HIGHEST      # keep f32-accurate interpolation
    y = jnp.einsum("oh,nchw->ncow", rh, x, precision=hp)
    return jnp.einsum("pw,ncow->ncop", rw, y, precision=hp)


# ----------------------------------------------------------------------------
# Synthetic sub-models + weight stacking
# ----------------------------------------------------------------------------
def make_submodel_params(key, cin, enc_ch, num_classes):
    """Channel-major fused head weights: rows = [encoder | classifier],
    split into xa / xb halves so concat(xa, xb) never materializes."""
    k1, k2, k3 = jax.random.split(key, 3)
    cout = enc_ch + num_classes
    return {
        "w_a": 0.1 * jax.random.normal(k1, (cout, cin), jnp.float32),
        "w_b": 0.1 * jax.random.normal(k2, (cout, cin), jnp.float32),
        "b":   0.1 * jax.random.normal(k3, (cout, 1), jnp.float32),
    }


def stack_ensemble_weights(models_params, enc_ch):
    """Classifier rows of ALL models stacked along Cout (so xa/xb are read from
    HBM once); encoder rows of ONLY the last model (others are dead outputs)."""
    w_cls_a = jnp.concatenate([p["w_a"][enc_ch:] for p in models_params], axis=0)
    w_cls_b = jnp.concatenate([p["w_b"][enc_ch:] for p in models_params], axis=0)
    b_cls = jnp.concatenate([p["b"][enc_ch:] for p in models_params], axis=0)
    last = models_params[-1]
    return (w_cls_a, w_cls_b, b_cls,
            last["w_a"][:enc_ch], last["w_b"][:enc_ch], last["b"][:enc_ch])


# ----------------------------------------------------------------------------
# Forward pass (method == 'avg2')
# ----------------------------------------------------------------------------
def ensemble_forward(models_params, xa, xb, *, input_size, enc_ch,
                     method="avg2", p_tile_target=16384, approx_recip=False):
    assert method == "avg2"
    num_models = len(models_params)
    N, C, H0, W0 = xa.shape

    # scale_input
    xa_s = resize_bilinear_matmul(xa, (input_size, input_size))
    xb_s = resize_bilinear_matmul(xb, (input_size, input_size))
    Ps = input_size * input_size
    # NCHW -> (N, Cin, H*W) is a pure reshape (pixels land on the lane axis).
    xa_f = _pad_lanes(xa_s.reshape(N, C, Ps))
    xb_f = _pad_lanes(xb_s.reshape(N, C, Ps))
    Pp = xa_f.shape[-1]

    (w_cls_a, w_cls_b, b_cls,
     w_enc_a, w_enc_b, b_enc) = stack_ensemble_weights(models_params, enc_ch)
    num_classes = w_cls_a.shape[0] // num_models

    # ONE fused pallas_call for all M heads.
    logits_all, enc = fused_heads_pallas(
        xa_f, xb_f, w_cls_a, w_cls_b, b_cls, w_enc_a, w_enc_b, b_enc,
        p_tile_target=p_tile_target)
    if Pp != Ps:
        logits_all = logits_all[..., :Ps]
        enc = enc[..., :Ps]
    encoder_feature = enc.reshape(N, enc_ch, input_size, input_size)

    # scale_output: resize all M models' logits back to original HxW in one shot.
    logits_img = logits_all.reshape(N, num_models * num_classes,
                                    input_size, input_size)
    logits_out = resize_bilinear_matmul(logits_img, (H0, W0))
    P0 = H0 * W0
    logits_flat = _pad_lanes(logits_out.reshape(N, num_models * num_classes, P0))

    pred = ensemble_softmax_argmax(logits_flat, num_models,
                                   p_tile_target=p_tile_target,
                                   approx_recip=approx_recip)
    cd_pred = pred[:, :P0].reshape(N, H0, W0)
    return encoder_feature, cd_pred


# ----------------------------------------------------------------------------
# Reference (pure JAX, gather-based resize) — mirrors the original module.
# ----------------------------------------------------------------------------
def bilinear_align_corners_ref(x, out_hw):
    N, C, H, W = x.shape
    out_h, out_w = out_hw
    if (H, W) == (out_h, out_w):
        return x
    ys = jnp.linspace(0.0, H - 1.0, out_h) if out_h > 1 else jnp.zeros((1,), jnp.float32)
    xs = jnp.linspace(0.0, W - 1.0, out_w) if out_w > 1 else jnp.zeros((1,), jnp.float32)
    y0 = jnp.clip(jnp.floor(ys).astype(jnp.int32), 0, H - 1)
    y1 = jnp.clip(y0 + 1, 0, H - 1)
    wy = ys - y0.astype(ys.dtype)
    x0 = jnp.clip(jnp.floor(xs).astype(jnp.int32), 0, W - 1)
    x1 = jnp.clip(x0 + 1, 0, W - 1)
    wx = xs - x0.astype(xs.dtype)
    g = x[:, :, :, x0] * (1.0 - wx) + x[:, :, :, x1] * wx
    return (g[:, :, y0, :] * (1.0 - wy)[None, None, :, None]
            + g[:, :, y1, :] * wy[None, None, :, None])


def ensemble_forward_ref(models_params, xa, xb, *, input_size, enc_ch):
    N, C, H0, W0 = xa.shape
    xa_s = bilinear_align_corners_ref(xa, (input_size, input_size))
    xb_s = bilinear_align_corners_ref(xb, (input_size, input_size))
    x = jnp.concatenate([xa_s, xb_s], axis=1)
    out1 = 0.0
    cd_pred = None
    enc = None
    hp = jax.lax.Precision.HIGHEST
    for params in models_params:
        w_full = jnp.concatenate([params["w_a"], params["w_b"]], axis=1)
        out = (jnp.einsum("oc,nchw->nohw", w_full, x, precision=hp)
               + params["b"][None, :, :, None])
        enc = out[:, :enc_ch]
        logits = out[:, enc_ch:]
        out0 = bilinear_align_corners_ref(logits, (H0, W0))
        out1 = out1 + jax.nn.softmax(out0, axis=1)
        cd_pred = jnp.argmax(out1, axis=1).astype(jnp.int32)
    return enc, cd_pred


# ----------------------------------------------------------------------------
if __name__ == "__main__":
    # Small shapes consistent with the forward: NCHW images, 2-class CD output.
    # H0*W0 = 256 and INPUT_SIZE^2 = 1024 are multiples of 128 -> lane-dense tiles.
    N, CIN, H0, W0 = 2, 4, 16, 16          # original image size
    INPUT_SIZE = 32                        # ScaleInOutput target
    NUM_MODELS = 3
    ENC_CH = 8
    NUM_CLASSES = 2

    key = jax.random.PRNGKey(0)
    ka, kb = jax.random.split(key)
    xa = jax.random.normal(ka, (N, CIN, H0, W0), jnp.float32)
    xb = jax.random.normal(kb, (N, CIN, H0, W0), jnp.float32)

    models_params = [
        make_submodel_params(jax.random.PRNGKey(100 + i), CIN, ENC_CH, NUM_CLASSES)
        for i in range(NUM_MODELS)
    ]

    fwd = jax.jit(functools.partial(ensemble_forward, input_size=INPUT_SIZE,
                                    enc_ch=ENC_CH, method="avg2"))
    enc_feat, cd_pred = fwd(models_params, xa, xb)
    jax.block_until_ready((enc_feat, cd_pred))

    # correctness check vs pure-JAX reference
    enc_ref, pred_ref = ensemble_forward_ref(models_params, xa, xb,
                                             input_size=INPUT_SIZE, enc_ch=ENC_CH)
    assert enc_feat.shape == (N, ENC_CH, INPUT_SIZE, INPUT_SIZE)
    assert cd_pred.shape == (N, H0, W0)
    assert jnp.allclose(enc_feat, enc_ref, atol=1e-4, rtol=1e-4), "encoder feature mismatch"
    assert jnp.array_equal(cd_pred, pred_ref), "cd_pred mismatch"

    print("KERNEL_OK")
</pallas_src>

<mosaic_0001>
module attributes {stable_mosaic.version = 11 : i64} {
  func.func @_fused_heads_kernel(%arg0: i32, %arg1: i32, %arg2: memref<1x4x1024xf32, #tpu.memory_space<vmem>>, %arg3: memref<1x4x1024xf32, #tpu.memory_space<vmem>>, %arg4: memref<6x4xf32, #tpu.memory_space<vmem>>, %arg5: memref<6x4xf32, #tpu.memory_space<vmem>>, %arg6: memref<6x1xf32, #tpu.memory_space<vmem>>, %arg7: memref<8x4xf32, #tpu.memory_space<vmem>>, %arg8: memref<8x4xf32, #tpu.memory_space<vmem>>, %arg9: memref<8x1xf32, #tpu.memory_space<vmem>>, %arg10: memref<1x6x1024xf32, #tpu.memory_space<vmem>>, %arg11: memref<1x8x1024xf32, #tpu.memory_space<vmem>>) attributes {dimension_semantics = [#tpu.dimension_semantics<parallel>, #tpu.dimension_semantics<parallel>], iteration_bounds = array<i64: 2, 1>, scalar_prefetch = 0 : i64, scratch_operands = 0 : i64, tpu.core_type = #tpu.core_type<tc>, window_params = [{transform_indices = @transform_0, window_bounds = array<i64: 1, 4, 1024>}, {transform_indices = @transform_1, window_bounds = array<i64: 1, 4, 1024>}, {pipeline_mode = #tpu.pipeline_mode<synchronous>, transform_indices = @transform_2, window_bounds = array<i64: 6, 4>}, {pipeline_mode = #tpu.pipeline_mode<synchronous>, transform_indices = @transform_3, window_bounds = array<i64: 6, 4>}, {pipeline_mode = #tpu.pipeline_mode<synchronous>, transform_indices = @transform_4, window_bounds = array<i64: 6, 1>}, {pipeline_mode = #tpu.pipeline_mode<synchronous>, transform_indices = @transform_5, window_bounds = array<i64: 8, 4>}, {pipeline_mode = #tpu.pipeline_mode<synchronous>, transform_indices = @transform_6, window_bounds = array<i64: 8, 4>}, {pipeline_mode = #tpu.pipeline_mode<synchronous>, transform_indices = @transform_7, window_bounds = array<i64: 8, 1>}, {transform_indices = @transform_8, window_bounds = array<i64: 1, 6, 1024>}, {transform_indices = @transform_9, window_bounds = array<i64: 1, 8, 1024>}]} {
    %c0 = arith.constant 0 : index
    %c0_0 = arith.constant 0 : index
    %c0_1 = arith.constant 0 : index
    %0 = vector.load %arg2[%c0, %c0_0, %c0_1] : memref<1x4x1024xf32, #tpu.memory_space<vmem>>, vector<1x4x1024xf32>
    %1 = vector.shape_cast %0 : vector<1x4x1024xf32> to vector<4x1024xf32>
    %c0_2 = arith.constant 0 : index
    %c0_3 = arith.constant 0 : index
    %c0_4 = arith.constant 0 : index
    %2 = vector.load %arg3[%c0_2, %c0_3, %c0_4] : memref<1x4x1024xf32, #tpu.memory_space<vmem>>, vector<1x4x1024xf32>
    %3 = vector.shape_cast %2 : vector<1x4x1024xf32> to vector<4x1024xf32>
    %c0_5 = arith.constant 0 : index
    %c0_6 = arith.constant 0 : index
    %4 = vector.load %arg4[%c0_5, %c0_6] : memref<6x4xf32, #tpu.memory_space<vmem>>, vector<6x4xf32>
    %cst = arith.constant dense<0.000000e+00> : vector<6x1024xf32>
    %5 = tpu.matmul %4, %1, %cst {dimension_numbers = #tpu.dot_dimension_numbers<[1], [0], [0], [1], [0, 0, 1, 1], [], []>} : vector<6x4xf32>, vector<4x1024xf32>, vector<6x1024xf32> -> vector<6x1024xf32>
    %c0_7 = arith.constant 0 : index
    %c0_8 = arith.constant 0 : index
    %6 = vector.load %arg5[%c0_7, %c0_8] : memref<6x4xf32, #tpu.memory_space<vmem>>, vector<6x4xf32>
    %cst_9 = arith.constant dense<0.000000e+00> : vector<6x1024xf32>
    %7 = tpu.matmul %6, %3, %cst_9 {dimension_numbers = #tpu.dot_dimension_numbers<[1], [0], [0], [1], [0, 0, 1, 1], [], []>} : vector<6x4xf32>, vector<4x1024xf32>, vector<6x1024xf32> -> vector<6x1024xf32>
    %8 = arith.addf %5, %7 : vector<6x1024xf32>
    %c0_10 = arith.constant 0 : index
    %c0_11 = arith.constant 0 : index
    %9 = vector.load %arg6[%c0_10, %c0_11] : memref<6x1xf32, #tpu.memory_space<vmem>>, vector<6x1xf32>
    %10 = vector.broadcast %9 : vector<6x1xf32> to vector<6x1024xf32>
    %11 = arith.addf %8, %10 : vector<6x1024xf32>
    %c0_12 = arith.constant 0 : index
    %c0_13 = arith.constant 0 : index
    %12 = vector.load %arg7[%c0_12, %c0_13] : memref<8x4xf32, #tpu.memory_space<vmem>>, vector<8x4xf32>
    %cst_14 = arith.constant dense<0.000000e+00> : vector<8x1024xf32>
    %13 = tpu.matmul %12, %1, %cst_14 {dimension_numbers = #tpu.dot_dimension_numbers<[1], [0], [0], [1], [0, 0, 1, 1], [], []>} : vector<8x4xf32>, vector<4x1024xf32>, vector<8x1024xf32> -> vector<8x1024xf32>
    %c0_15 = arith.constant 0 : index
    %c0_16 = arith.constant 0 : index
    %14 = vector.load %arg8[%c0_15, %c0_16] : memref<8x4xf32, #tpu.memory_space<vmem>>, vector<8x4xf32>
    %cst_17 = arith.constant dense<0.000000e+00> : vector<8x1024xf32>
    %15 = tpu.matmul %14, %3, %cst_17 {dimension_numbers = #tpu.dot_dimension_numbers<[1], [0], [0], [1], [0, 0, 1, 1], [], []>} : vector<8x4xf32>, vector<4x1024xf32>, vector<8x1024xf32> -> vector<8x1024xf32>
    %16 = arith.addf %13, %15 : vector<8x1024xf32>
    %c0_18 = arith.constant 0 : index
    %c0_19 = arith.constant 0 : index
    %17 = vector.load %arg9[%c0_18, %c0_19] : memref<8x1xf32, #tpu.memory_space<vmem>>, vector<8x1xf32>
    %18 = vector.broadcast %17 : vector<8x1xf32> to vector<8x1024xf32>
    %19 = arith.addf %16, %18 : vector<8x1024xf32>
    %c0_20 = arith.constant 0 : index
    %c0_21 = arith.constant 0 : index
    %c0_22 = arith.constant 0 : index
    %20 = vector.load %arg10[%c0_20, %c0_21, %c0_22] : memref<1x6x1024xf32, #tpu.memory_space<vmem>>, vector<1x6x1024xf32>
    %21 = vector.shape_cast %20 : vector<1x6x1024xf32> to vector<6x1024xf32>
    %22 = vector.shape_cast %11 : vector<6x1024xf32> to vector<1x6x1024xf32>
    tpu.vector_store %arg10[%c0_20, %c0_21, %c0_22], %22 {strides = array<i32>} : memref<1x6x1024xf32, #tpu.memory_space<vmem>>, vector<1x6x1024xf32>,
    %c0_23 = arith.constant 0 : index
    %c0_24 = arith.constant 0 : index
    %c0_25 = arith.constant 0 : index
    %23 = vector.load %arg11[%c0_23, %c0_24, %c0_25] : memref<1x8x1024xf32, #tpu.memory_space<vmem>>, vector<1x8x1024xf32>
    %24 = vector.shape_cast %23 : vector<1x8x1024xf32> to vector<8x1024xf32>
    %25 = vector.shape_cast %19 : vector<8x1024xf32> to vector<1x8x1024xf32>
    tpu.vector_store %arg11[%c0_23, %c0_24, %c0_25], %25 {strides = array<i32>} : memref<1x8x1024xf32, #tpu.memory_space<vmem>>, vector<1x8x1024xf32>,
    return
  }
  func.func @transform_0(%arg0: i32, %arg1: i32) -> (i32, i32, i32) {
    %c0_i32 = arith.constant 0 : i32
    %c0_i32_0 = arith.constant 0 : i32
    return %arg0, %c0_i32, %arg1 : i32, i32, i32
  }
  func.func @transform_1(%arg0: i32, %arg1: i32) -> (i32, i32, i32) {
    %c0_i32 = arith.constant 0 : i32
    %c0_i32_0 = arith.constant 0 : i32
    return %arg0, %c0_i32, %arg1 : i32, i32, i32
  }
  func.func @transform_2(%arg0: i32, %arg1: i32) -> (i32, i32) {
    %c0_i32 = arith.constant 0 : i32
    %c0_i32_0 = arith.constant 0 : i32
    %c0_i32_1 = arith.constant 0 : i32
    return %c0_i32, %c0_i32_0 : i32, i32
  }
  func.func @transform_3(%arg0: i32, %arg1: i32) -> (i32, i32) {
    %c0_i32 = arith.constant 0 : i32
    %c0_i32_0 = arith.constant 0 : i32
    %c0_i32_1 = arith.constant 0 : i32
    return %c0_i32, %c0_i32_0 : i32, i32
  }
  func.func @transform_4(%arg0: i32, %arg1: i32) -> (i32, i32) {
    %c0_i32 = arith.constant 0 : i32
    %c0_i32_0 = arith.constant 0 : i32
    %c0_i32_1 = arith.constant 0 : i32
    return %c0_i32, %c0_i32_0 : i32, i32
  }
  func.func @transform_5(%arg0: i32, %arg1: i32) -> (i32, i32) {
    %c0_i32 = arith.constant 0 : i32
    %c0_i32_0 = arith.constant 0 : i32
    %c0_i32_1 = arith.constant 0 : i32
    return %c0_i32, %c0_i32_0 : i32, i32
  }
  func.func @transform_6(%arg0: i32, %arg1: i32) -> (i32, i32) {
    %c0_i32 = arith.constant 0 : i32
    %c0_i32_0 = arith.constant 0 : i32
    %c0_i32_1 = arith.constant 0 : i32
    return %c0_i32, %c0_i32_0 : i32, i32
  }
  func.func @transform_7(%arg0: i32, %arg1: i32) -> (i32, i32) {
    %c0_i32 = arith.constant 0 : i32
    %c0_i32_0 = arith.constant 0 : i32
    %c0_i32_1 = arith.constant 0 : i32
    return %c0_i32, %c0_i32_0 : i32, i32
  }
  func.func @transform_8(%arg0: i32, %arg1: i32) -> (i32, i32, i32) {
    %c0_i32 = arith.constant 0 : i32
    %c0_i32_0 = arith.constant 0 : i32
    return %arg0, %c0_i32, %arg1 : i32, i32, i32
  }
  func.func @transform_9(%arg0: i32, %arg1: i32) -> (i32, i32, i32) {
    %c0_i32 = arith.constant 0 : i32
    %c0_i32_0 = arith.constant 0 : i32
    return %arg0, %c0_i32, %arg1 : i32, i32, i32
  }
}

module attributes {stable_mosaic.version = 11 : i64} {
  func.func @kernel(%arg0: i32, %arg1: i32, %arg2: memref<1x6x256xf32, #tpu.memory_space<vmem>>, %arg3: memref<1x1x256xi32, #tpu.memory_space<vmem>>) attributes {dimension_semantics = [#tpu.dimension_semantics<parallel>, #tpu.dimension_semantics<parallel>], iteration_bounds = array<i64: 2, 1>, scalar_prefetch = 0 : i64, scratch_operands = 0 : i64, tpu.core_type = #tpu.core_type<tc>, window_params = [{transform_indices = @transform_0, window_bounds = array<i64: 1, 6, 256>}, {transform_indices = @transform_1, window_bounds = array<i64: 1, 1, 256>}]} {
    %c0 = arith.constant 0 : index
    %c0_0 = arith.constant 0 : index
    %c0_1 = arith.constant 0 : index
    %0 = vector.load %arg2[%c0, %c0_0, %c0_1] : memref<1x6x256xf32, #tpu.memory_space<vmem>>, vector<1x6x256xf32>
    %1 = vector.shape_cast %0 : vector<1x6x256xf32> to vector<6x256xf32>
    %2 = vector.extract_strided_slice %1 {offsets = [0, 0], sizes = [2, 256], strides = [1, 1]} : vector<6x256xf32> to vector<2x256xf32>
    %cst = arith.constant dense<0xFF800000> : vector<256xf32>
    %3 = vector.multi_reduction <maximumf>, %2, %cst [0] : vector<2x256xf32> to vector<256xf32>
    %4 = vector.shape_cast %3 : vector<256xf32> to vector<1x256xf32>
    %5 = vector.broadcast %4 : vector<1x256xf32> to vector<2x256xf32>
    %6 = arith.subf %2, %5 : vector<2x256xf32>
    %7 = math.exp %6 : vector<2x256xf32>
    %cst_2 = arith.constant dense<0.000000e+00> : vector<256xf32>
    %8 = vector.multi_reduction <add>, %7, %cst_2 [0] : vector<2x256xf32> to vector<256xf32>
    %9 = vector.shape_cast %8 : vector<256xf32> to vector<1x256xf32>
    %10 = tpu.reciprocal %9 : vector<1x256xf32> -> vector<1x256xf32>
    %11 = vector.broadcast %10 : vector<1x256xf32> to vector<2x256xf32>
    %12 = arith.mulf %7, %11 : vector<2x256xf32>
    %13 = vector.extract_strided_slice %1 {offsets = [2, 0], sizes = [2, 256], strides = [1, 1]} : vector<6x256xf32> to vector<2x256xf32>
    %cst_3 = arith.constant dense<0xFF800000> : vector<256xf32>
    %14 = vector.multi_reduction <maximumf>, %13, %cst_3 [0] : vector<2x256xf32> to vector<256xf32>
    %15 = vector.shape_cast %14 : vector<256xf32> to vector<1x256xf32>
    %16 = vector.broadcast %15 : vector<1x256xf32> to vector<2x256xf32>
    %17 = arith.subf %13, %16 : vector<2x256xf32>
    %18 = math.exp %17 : vector<2x256xf32>
    %cst_4 = arith.constant dense<0.000000e+00> : vector<256xf32>
    %19 = vector.multi_reduction <add>, %18, %cst_4 [0] : vector<2x256xf32> to vector<256xf32>
    %20 = vector.shape_cast %19 : vector<256xf32> to vector<1x256xf32>
    %21 = tpu.reciprocal %20 : vector<1x256xf32> -> vector<1x256xf32>
    %22 = vector.broadcast %21 : vector<1x256xf32> to vector<2x256xf32>
    %23 = arith.mulf %18, %22 : vector<2x256xf32>
    %24 = arith.addf %12, %23 : vector<2x256xf32>
    %25 = vector.extract_strided_slice %1 {offsets = [4, 0], sizes = [2, 256], strides = [1, 1]} : vector<6x256xf32> to vector<2x256xf32>
    %cst_5 = arith.constant dense<0xFF800000> : vector<256xf32>
    %26 = vector.multi_reduction <maximumf>, %25, %cst_5 [0] : vector<2x256xf32> to vector<256xf32>
    %27 = vector.shape_cast %26 : vector<256xf32> to vector<1x256xf32>
    %28 = vector.broadcast %27 : vector<1x256xf32> to vector<2x256xf32>
    %29 = arith.subf %25, %28 : vector<2x256xf32>
    %30 = math.exp %29 : vector<2x256xf32>
    %cst_6 = arith.constant dense<0.000000e+00> : vector<256xf32>
    %31 = vector.multi_reduction <add>, %30, %cst_6 [0] : vector<2x256xf32> to vector<256xf32>
    %32 = vector.shape_cast %31 : vector<256xf32> to vector<1x256xf32>
    %33 = tpu.reciprocal %32 : vector<1x256xf32> -> vector<1x256xf32>
    %34 = vector.broadcast %33 : vector<1x256xf32> to vector<2x256xf32>
    %35 = arith.mulf %30, %34 : vector<2x256xf32>
    %36 = arith.addf %24, %35 : vector<2x256xf32>
    %37 = vector.extract_strided_slice %36 {offsets = [0, 0], sizes = [1, 256], strides = [1, 1]} : vector<2x256xf32> to vector<1x256xf32>
    %c0_i32 = arith.constant 0 : i32
    %38 = vector.broadcast %c0_i32 : i32 to vector<1x256xi32>
    %39 = vector.extract_strided_slice %36 {offsets = [1, 0], sizes = [1, 256], strides = [1, 1]} : vector<2x256xf32> to vector<1x256xf32>
    %40 = arith.cmpf ogt, %39, %37 : vector<1x256xf32>
    %c1_i32 = arith.constant 1 : i32
    %41 = vector.broadcast %c1_i32 : i32 to vector<1x256xi32>
    %42 = arith.select %40, %41, %38 : vector<1x256xi1>, vector<1x256xi32>
    %c0_7 = arith.constant 0 : index
    %c0_8 = arith.constant 0 : index
    %c0_9 = arith.constant 0 : index
    %43 = vector.load %arg3[%c0_7, %c0_8, %c0_9] : memref<1x1x256xi32, #tpu.memory_space<vmem>>, vector<1x1x256xi32>
    %44 = vector.shape_cast %43 : vector<1x1x256xi32> to vector<1x256xi32>
    %45 = vector.shape_cast %42 : vector<1x256xi32> to vector<1x1x256xi32>
    tpu.vector_store %arg3[%c0_7, %c0_8, %c0_9], %45 {strides = array<i32>} : memref<1x1x256xi32, #tpu.memory_space<vmem>>, vector<1x1x256xi32>,
    return
  }
  func.func @transform_0(%arg0: i32, %arg1: i32) -> (i32, i32, i32) {
    %c0_i32 = arith.constant 0 : i32
    %c0_i32_0 = arith.constant 0 : i32
    return %arg0, %c0_i32, %arg1 : i32, i32, i32
  }
  func.func @transform_1(%arg0: i32, %arg1: i32) -> (i32, i32, i32) {
    %c0_i32 = arith.constant 0 : i32
    %c0_i32_0 = arith.constant 0 : i32
    return %arg0, %c0_i32, %arg1 : i32, i32, i32
  }
}

</mosaic_0001>

<llo_original>
// kernel: ensemble_forward.3
$region0: #{ensemble_forward.3}
  #allocation0 [shape = 'u32[]', space=smem, size = 0x4, offset = 0x4, fixed_abs, tag = 'smem constant byte address 0x4 - core index']
  #allocation1 [shape = 'u32[144,128]{1,0:T(1,128)}', space=vmem, size = 0x12000, scoped, tag = 'internal scratch']
  %s0 = inlined_call_operand.vmem [shape: f32[2,6,256], index: 0, kind: input, shape index: {}]
  %s1 = inlined_call_operand.vmem [shape: s32[2,1,256], index: 1, kind: output, shape index: {}]
  %s2 = sld [smem:[#allocation0]]
  $region37: #{ensemble_forward.3} parent=0
    _
  %s4 = ssub.s32 1, %s2
  %s5 = scalar_select 0, %s4, %s2
  loop: start=0, step=1, limit=4
  $region2: #{ensemble_forward.3} parent=0 // loop_pre_header
    _
  $region3: #{ensemble_forward.3} parent=0 // loop_header
    %s7 = sphi 0, %s11
    %p8 = scmp.ge.s32.totalorder %s7, 4
    %s14 = sphi 0, %s26
    %s15 = sphi 0, %s22
    %s16 = sphi 0, %s14
    %s17 = sphi 0, %s15
    %s18 = sphi 0, %s16
    %s19 = sphi 0, %s17
    %s31 = sphi 0, %s33
    %s34 = sphi 0, %s31
    %s35 = sphi 0, %s34
    %s51 = sphi 0, %s35
    %s59 = sphi 0, %s61
    %s62 = sphi 0, %s59
    %s63 = sphi 0, %s62
    %s79 = sphi 0, %s63
  $region4: #{ensemble_forward.3} parent=0 // loop_header_branch
    %10 = sbr.rel (%p8) target = $region8
  $region5: #{ensemble_forward.3} parent=0 // loop_body
    %s12 = ssub.s32 %s7, 1
    %s13 = ssub.s32 %s7, 2
    %s20 = sadd.s32 1, %s15
    %p21 = scmp.ge.s32.totalorder %s20, 1
    %s22 = scalar_select %p21, 0, %s20
    %s23 = sadd.s32 1, %s14
    %s24 = scalar_select %p21, %s23, %s14
    %p25 = scmp.ge.s32.totalorder %s24, 2
    %s26 = scalar_select %p25, 0, %s24
    %s27 = ssub.s32 %s14, %s26
    %s28 = ssub.s32 %s15, %s22
    %s29 = sor.u32 %s27, %s28
    %p30 = scmp.eq.s32.totalorder %s29, 0
    %s32 = sadd.s32 %s31, 1
    %s33 = scalar_select %p30, %s31, %s32
    %p36 = pneg %p30
    %p37 = scmp.eq.s32.totalorder %s7, 1
    %p38 = por %p36, %p37
    %p39 = scmp.ne.s32.totalorder %s31, %s34
    %p40 = scmp.eq.s32.totalorder %s7, 0
    %p41 = por %p39, %p40
    %p42 = scmp.ne.s32.totalorder %s31, %s34
    %p43 = scmp.eq.s32.totalorder %s12, 1
    %p44 = por %p42, %p43
    %p45 = scmp.ne.s32.totalorder %s34, %s35
    %p46 = scmp.eq.s32.totalorder %s12, 0
    %p47 = por %p45, %p46
    %p48 = scmp.ne.s32.totalorder %s34, %s35
    %p49 = scmp.eq.s32.totalorder %s13, 1
    %p50 = por %p48, %p49
    %p52 = scmp.ne.s32.totalorder %s35, %s51
    %p53 = scmp.eq.s32.totalorder %s13, 0
    %p54 = por %p52, %p53
    %s55 = ssub.s32 %s14, %s26
    %s56 = ssub.s32 %s15, %s22
    %s57 = sor.u32 %s55, %s56
    %p58 = scmp.eq.s32.totalorder %s57, 0
    %s60 = sadd.s32 %s59, 1
    %s61 = scalar_select %p58, %s59, %s60
    %p64 = pneg %p58
    %p65 = scmp.eq.s32.totalorder %s7, 1
    %p66 = por %p64, %p65
    %p67 = scmp.ne.s32.totalorder %s59, %s62
    %p68 = scmp.eq.s32.totalorder %s7, 0
    %p69 = por %p67, %p68
    %p70 = scmp.ne.s32.totalorder %s59, %s62
    %p71 = scmp.eq.s32.totalorder %s12, 1
    %p72 = por %p70, %p71
    %p73 = scmp.ne.s32.totalorder %s62, %s63
    %p74 = scmp.eq.s32.totalorder %s12, 0
    %p75 = por %p73, %p74
    %p76 = scmp.ne.s32.totalorder %s62, %s63
    %p77 = scmp.eq.s32.totalorder %s13, 1
    %p78 = por %p76, %p77
    %p80 = scmp.ne.s32.totalorder %s63, %s79
    %p81 = scmp.eq.s32.totalorder %s13, 0
    %p82 = por %p80, %p81
    %p83 = scmp.le.s32.totalorder 1, %s7
    %p84 = scmp.lt.s32.totalorder %s7, 3
    %p85 = pnand %p83, %p84
    %p86 = pneg %p85
    // Predicated region
    $region9: #{ensemble_forward.3} parent=5 // pred_check
      _
    $region10: #{ensemble_forward.3} parent=5 // pred_check_branch
      %88 = sbr.rel (%p85) target = $region12
    $region11: #{ensemble_forward.3} parent=5 // pred_region
      %s89 = ssub.s32 %s7, 1
    $region12: #{ensemble_forward.3} parent=5 // pred_fallthru
      _
    %p90 = scmp.lt.s32.totalorder %s7, 2
    // Predicated region
    $region13: #{ensemble_forward.3} parent=5 // pred_check
      %p91 = pneg %p90
    $region14: #{ensemble_forward.3} parent=5 // pred_check_branch
      %93 = sbr.rel (%p91) target = $region16
    $region15: #{ensemble_forward.3} parent=5 // pred_region
      // Predicated region
      $region17: #{ensemble_forward.3} parent=15 // pred_check
        %p94 = pneg %p41
      $region18: #{ensemble_forward.3} parent=15 // pred_check_branch
        %96 = sbr.rel (%p94) target = $region20
      $region19: #{ensemble_forward.3} parent=15 // pred_region
        %s97 = smul.u32 2, %s15
        %p98 = scmp.lt.s32.totalorder %s14, 1
        %s99 = scalar_select %p98, %s14, 1
        %p100 = scmp.lt.s32.totalorder %s97, 1
        %s101 = scalar_select %p100, %s97, 1
        %s102 = smul.addr %s99, 2
        %s103 = sadd.s32 %s101, %s102
        %s104 = smul.addr %s103, 8
        %s105 = scalar_lea.vmem %s0, %s104
        %s106 = smul.u32 2, %s15
      $region20: #{ensemble_forward.3} parent=15 // pred_fallthru
        _
    $region16: #{ensemble_forward.3} parent=5 // pred_fallthru
      _
    %p107 = scmp.le.s32.totalorder 1, %s7
    %p108 = scmp.lt.s32.totalorder %s7, 3
    %p109 = pnand %p107, %p108
    %p110 = pneg %p109
    // Predicated region
    $region21: #{ensemble_forward.3} parent=5 // pred_check
      _
    $region22: #{ensemble_forward.3} parent=5 // pred_check_branch
      %112 = sbr.rel (%p109) target = $region24
    $region23: #{ensemble_forward.3} parent=5 // pred_region
      %s113 = ssub.s32 %s7, 1
      %s114 = smul.u32 2, %s17
      %p115 = scmp.lt.s32.totalorder %s16, 1
      %s116 = scalar_select %p115, %s16, 1
      %p117 = scmp.lt.s32.totalorder %s114, 1
      %s118 = scalar_select %p117, %s114, 1
      %s119 = smul.addr %s116, 2
      %s120 = sadd.s32 %s118, %s119
      %s121 = smul.addr %s120, 8
      %s122 = scalar_lea.vmem %s0, %s121
      %p123 = pneg %p47
      %p124 = pneg %p44
      %p125 = pneg %p75
      %p126 = pneg %p72
      %s127 = smul.u32 2, %s17
      %p128 = scmp.lt.s32.totalorder %s16, 1
      %s129 = scalar_select %p128, %s16, 1
      %p130 = scmp.lt.s32.totalorder %s127, 1
      %s131 = scalar_select %p130, %s127, 1
      %s132 = smul.addr %s129, 2
      %s133 = sadd.s32 %s131, %s132
      %s134 = scalar_lea.vmem %s1, %s133
      %s135 = smul.u32 2, %s17
      %p136 = scmp.lt.s32.totalorder %s16, 1
      %s137 = scalar_select %p136, %s16, 1
      %p138 = scmp.lt.s32.totalorder %s135, 1
      %s139 = scalar_select %p138, %s135, 1
      %s140 = smul.addr %s137, 2
      %s141 = sadd.s32 %s139, %s140
      %s142 = smul.addr %s141, 8
      %s143 = scalar_lea.vmem %s0, %s142
      %s144 = smul.u32 2, %s17
      %s145 = smul.u32 2, %s17
      %p146 = scmp.lt.s32.totalorder %s16, 1
      %s147 = scalar_select %p146, %s16, 1
      %p148 = scmp.lt.s32.totalorder %s145, 1
      %s149 = scalar_select %p148, %s145, 1
      %s150 = smul.addr %s147, 2
      %s151 = sadd.s32 %s149, %s150
      %s152 = scalar_lea.vmem %s1, %s151
      %s153 = smul.u32 2, %s17
      %v154 = vld [vmem:[%s143] sm:$0x3f]
      %v155 = vld [vmem:[%s143 + $0x8] sm:$0x3f]
      %vm156 = vcmask 1041408
      %v157 = vsel %vm156, %v154, -inf
      %v158 = vrot.slane %v157, 4
      %v159 = vmax.f32 %v157, %v158
      %v160 = vrot.slane %v159, 2
      %v161 = vmax.f32 %v159, %v160
      %v162 = vrot.slane %v161, 1
      %v163 = vmax.f32 %v161, %v162
      %v164 = vsel %vm156, %v155, -inf
      %v165 = vrot.slane %v164, 4
      %v166 = vmax.f32 %v164, %v165
      %v167 = vrot.slane %v166, 2
      %v168 = vmax.f32 %v166, %v167
      %v169 = vrot.slane %v168, 1
      %v170 = vmax.f32 %v168, %v169
      %v171 = vsub.f32 %v154, %v163
      %v172 = vsub.f32 %v155, %v170
      %v173 = vmul.f32 %v171, 1.442695
      %v174 = vpow.pop %v173
      %v175 = vmul.f32 %v172, 1.442695
      %v176 = vpow.pop %v175
      %v177 = vsel %vm156, %v174, 0.0
      %v178 = vrot.slane %v177, 4
      %v179 = vadd.f32 %v177, %v178
      %v180 = vrot.slane %v179, 2
      %v181 = vadd.f32 %v179, %v180
      %v182 = vrot.slane %v181, 1
      %v183 = vadd.f32 %v181, %v182
      %v184 = vsel %vm156, %v176, 0.0
      %v185 = vrot.slane %v184, 4
      %v186 = vadd.f32 %v184, %v185
      %v187 = vrot.slane %v186, 2
      %v188 = vadd.f32 %v186, %v187
      %v189 = vrot.slane %v188, 1
      %v190 = vadd.f32 %v188, %v189
      %v191 = vrcp.pop %v183
      %v192 = vrcp.pop %v190
      %v193 = vmul.f32 %v174, %v191
      %v194 = vmul.f32 %v176, %v192
      %vm195 = vcmask 1043458
      %v196 = vsel %vm195, %v154, -inf
      %v197 = vrot.slane %v196, 4
      %v198 = vmax.f32 %v196, %v197
      %v199 = vrot.slane %v198, 2
      %v200 = vmax.f32 %v198, %v199
      %v201 = vrot.slane %v200, 1
      %v202 = vmax.f32 %v200, %v201
      %v203 = vsel %vm195, %v155, -inf
      %v204 = vrot.slane %v203, 4
      %v205 = vmax.f32 %v203, %v204
      %v206 = vrot.slane %v205, 2
      %v207 = vmax.f32 %v205, %v206
      %v208 = vrot.slane %v207, 1
      %v209 = vmax.f32 %v207, %v208
      %v210 = vsub.f32 %v154, %v202
      %v211 = vsub.f32 %v155, %v209
      %v212 = vmul.f32 %v210, 1.442695
      %v213 = vpow.pop %v212
      %v214 = vmul.f32 %v211, 1.442695
      %v215 = vpow.pop %v214
      %v218 = vrot.slane %v213, 2
      %v219 = vrot.slane %v215, 2
      %v222 = vsel %vm156, %v218, 0.0
      %v223 = vrot.slane %v222, 4
      %v224 = vadd.f32 %v222, %v223
      %v225 = vrot.slane %v224, 2
      %v226 = vadd.f32 %v224, %v225
      %v227 = vrot.slane %v226, 1
      %v228 = vadd.f32 %v226, %v227
      %v229 = vsel %vm156, %v219, 0.0
      %v230 = vrot.slane %v229, 4
      %v231 = vadd.f32 %v229, %v230
      %v232 = vrot.slane %v231, 2
      %v233 = vadd.f32 %v231, %v232
      %v234 = vrot.slane %v233, 1
      %v235 = vadd.f32 %v233, %v234
      %v236 = vrcp.pop %v228
      %v237 = vrcp.pop %v235
      %v238 = vmul.f32 %v213, %v236
      %v239 = vmul.f32 %v215, %v237
      %v242 = vrot.slane %v238, 2
      %v243 = vrot.slane %v239, 2
      %v246 = vadd.f32 %v193, %v242
      %v247 = vadd.f32 %v194, %v243
      %vm248 = vcmask 1045508
      %v249 = vsel %vm248, %v154, -inf
      %v250 = vrot.slane %v249, 4
      %v251 = vmax.f32 %v249, %v250
      %v252 = vrot.slane %v251, 2
      %v253 = vmax.f32 %v251, %v252
      %v254 = vrot.slane %v253, 1
      %v255 = vmax.f32 %v253, %v254
      %v256 = vsel %vm248, %v155, -inf
      %v257 = vrot.slane %v256, 4
      %v258 = vmax.f32 %v256, %v257
      %v259 = vrot.slane %v258, 2
      %v260 = vmax.f32 %v258, %v259
      %v261 = vrot.slane %v260, 1
      %v262 = vmax.f32 %v260, %v261
      %v263 = vsub.f32 %v154, %v255
      %v264 = vsub.f32 %v155, %v262
      %v265 = vmul.f32 %v263, 1.442695
      %v266 = vpow.pop %v265
      %v267 = vmul.f32 %v264, 1.442695
      %v268 = vpow.pop %v267
      %v271 = vrot.slane %v266, 4
      %v272 = vrot.slane %v268, 4
      %v275 = vsel %vm156, %v271, 0.0
      %v276 = vrot.slane %v275, 4
      %v277 = vadd.f32 %v275, %v276
      %v278 = vrot.slane %v277, 2
      %v279 = vadd.f32 %v277, %v278
      %v280 = vrot.slane %v279, 1
      %v281 = vadd.f32 %v279, %v280
      %v282 = vsel %vm156, %v272, 0.0
      %v283 = vrot.slane %v282, 4
      %v284 = vadd.f32 %v282, %v283
      %v285 = vrot.slane %v284, 2
      %v286 = vadd.f32 %v284, %v285
      %v287 = vrot.slane %v286, 1
      %v288 = vadd.f32 %v286, %v287
      %v289 = vrcp.pop %v281
      %v290 = vrcp.pop %v288
      %v291 = vmul.f32 %v266, %v289
      %v292 = vmul.f32 %v268, %v290
      %v295 = vrot.slane %v291, 4
      %v296 = vrot.slane %v292, 4
      %v299 = vadd.f32 %v246, %v295
      %v300 = vadd.f32 %v247, %v296
      %v303 = vrot.slane %v299, 7
      %v304 = vrot.slane %v300, 7
      %vm307 = vcmp.gt.f32.partialorder %v299, %v303
      %vm308 = vcmp.gt.f32.partialorder %v300, %v304
      %v309 = vsel %vm307, 1, 0
      %v310 = vsel %vm308, 1, 0
      %v311 = vcombine.low %v309, %v310
      %v313 = vunpack.c.l.s4 1966171168
      %v314 = vunpack.c.0.s8 %v313
      %v315 = vlaneseq
      %v316 = vshrl.u32 %v315, 7
      %v317 = vsub.s32 %v314, %v316
      %v318 = vrot.slane %v311, %v317
      %v319 = vcombine.high %v318, %v318
      %v321 = vunpack.c.l.s4 1966171168
      %v322 = vunpack.c.0.s8 %v321
      %v323 = vlaneseq
      %v324 = vshrl.u32 %v323, 7
      %v325 = vsub.s32 %v322, %v324
      %v326 = vrot.slane %v319, %v325
      %v327 = vlaneseq
      %vm328 = vcmp.ge.s32.totalorder %v327, 0
      %vm329 = vcmp.lt.s32.totalorder %v327, 256
      %vm330 = vmand %vm328, %vm329
      %331 = vst.msk [vmem:[%s152] sm:$0x3] %vm330, %v326
      %s332 = smul.u32 2, %s17
      %p333 = scmp.lt.s32.totalorder %s16, 1
      %s334 = scalar_select %p333, %s16, 1
      %p335 = scmp.lt.s32.totalorder %s332, 1
      %s336 = scalar_select %p335, %s332, 1
      %s337 = smul.addr %s334, 2
      %s338 = sadd.s32 %s336, %s337
      %s339 = scalar_lea.vmem %s1, %s338
      // Predicated region
      $region25: #{ensemble_forward.3} parent=23 // pred_check
        %p340 = pneg %p72
      $region26: #{ensemble_forward.3} parent=23 // pred_check_branch
        %342 = sbr.rel (%p340) target = $region28
      $region27: #{ensemble_forward.3} parent=23 // pred_region
        %s343 = smul.u32 2, %s17
      $region28: #{ensemble_forward.3} parent=23 // pred_fallthru
        _
    $region24: #{ensemble_forward.3} parent=5 // pred_fallthru
      _
    %p344 = scmp.le.s32.totalorder 2, %s7
    // Predicated region
    $region29: #{ensemble_forward.3} parent=5 // pred_check
      %p345 = pneg %p344
    $region30: #{ensemble_forward.3} parent=5 // pred_check_branch
      %347 = sbr.rel (%p345) target = $region32
    $region31: #{ensemble_forward.3} parent=5 // pred_region
      %s348 = ssub.s32 %s7, 2
      // Predicated region
      $region33: #{ensemble_forward.3} parent=31 // pred_check
        %p349 = pneg %p78
      $region34: #{ensemble_forward.3} parent=31 // pred_check_branch
        %351 = sbr.rel (%p349) target = $region36
      $region35: #{ensemble_forward.3} parent=31 // pred_region
        %s352 = smul.u32 2, %s19
        %p353 = scmp.lt.s32.totalorder %s18, 1
        %s354 = scalar_select %p353, %s18, 1
        %p355 = scmp.lt.s32.totalorder %s352, 1
        %s356 = scalar_select %p355, %s352, 1
        %s357 = smul.addr %s354, 2
        %s358 = sadd.s32 %s356, %s357
        %s359 = scalar_lea.vmem %s1, %s358
      $region36: #{ensemble_forward.3} parent=31 // pred_fallthru
        _
    $region32: #{ensemble_forward.3} parent=5 // pred_fallthru
      _
  $region6: #{ensemble_forward.3} parent=0 // loop_footer
    %s11 = sadd.s32 1, %s7
  $region7: #{ensemble_forward.3} parent=0 // loop_footer_branch
    %6 = sbr.rel target = $region3
  $region8: #{ensemble_forward.3} parent=0 // loop_exit
    _

// kernel: ensemble_forward.2
$region0: #{ensemble_forward.2}
  #allocation0 [shape = 'u32[]', space=smem, size = 0x4, offset = 0x4, fixed_abs, tag = 'smem constant byte address 0x4 - core index']
  #allocation1 [shape = 'u32[144,128]{1,0:T(1,128)}', space=vmem, size = 0x12000, scoped, tag = 'internal scratch']
  %s0 = inlined_call_operand.vmem [shape: f32[2,4,1024], index: 0, kind: input, shape index: {}]
  %s1 = inlined_call_operand.vmem [shape: f32[2,4,1024], index: 1, kind: input, shape index: {}]
  %s2 = inlined_call_operand.vmem [shape: f32[6,4], index: 2, kind: input, shape index: {}]
  %s3 = inlined_call_operand.vmem [shape: f32[6,4], index: 3, kind: input, shape index: {}]
  %s4 = inlined_call_operand.vmem [shape: f32[6,1], index: 4, kind: input, shape index: {}]
  %s5 = inlined_call_operand.vmem [shape: f32[8,4], index: 5, kind: input, shape index: {}]
  %s6 = inlined_call_operand.vmem [shape: f32[8,4], index: 6, kind: input, shape index: {}]
  %s7 = inlined_call_operand.vmem [shape: f32[8,1], index: 7, kind: input, shape index: {}]
  %s8 = inlined_call_operand.vmem [shape: f32[2,6,1024], index: 8, kind: output, shape index: {0}]
  %s9 = inlined_call_operand.vmem [shape: f32[2,8,1024], index: 9, kind: output, shape index: {1}]
  %10 = xla_tuple %s8, %s9
  %s11 = sld [smem:[#allocation0]]
  $region73: #{ensemble_forward.2} parent=0
    _
  %s13 = ssub.s32 1, %s11
  %s14 = scalar_select 0, %s13, %s11
  loop: start=0, step=1, limit=4
  $region2: #{ensemble_forward.2} parent=0 // loop_pre_header
    _
  $region3: #{ensemble_forward.2} parent=0 // loop_header
    %s16 = sphi 0, %s20
    %p17 = scmp.ge.s32.totalorder %s16, 4
    %s23 = sphi 0, %s35
    %s24 = sphi 0, %s31
    %s25 = sphi 0, %s23
    %s26 = sphi 0, %s24
    %s27 = sphi 0, %s25
    %s28 = sphi 0, %s26
    %s40 = sphi 0, %s42
    %s43 = sphi 0, %s40
    %s44 = sphi 0, %s43
    %s60 = sphi 0, %s44
    %s68 = sphi 0, %s70
    %s71 = sphi 0, %s68
    %s72 = sphi 0, %s71
    %s88 = sphi 0, %s72
    %s92 = sphi 0, %s92
    %s94 = sphi 0, %s92
    %s95 = sphi 0, %s94
    %s109 = sphi 0, %s95
    %s113 = sphi 0, %s113
    %s115 = sphi 0, %s113
    %s116 = sphi 0, %s115
    %s130 = sphi 0, %s116
    %s134 = sphi 0, %s134
    %s136 = sphi 0, %s134
    %s137 = sphi 0, %s136
    %s151 = sphi 0, %s137
    %s155 = sphi 0, %s155
    %s157 = sphi 0, %s155
    %s158 = sphi 0, %s157
    %s172 = sphi 0, %s158
    %s176 = sphi 0, %s176
    %s178 = sphi 0, %s176
    %s179 = sphi 0, %s178
    %s193 = sphi 0, %s179
    %s197 = sphi 0, %s197
    %s199 = sphi 0, %s197
    %s200 = sphi 0, %s199
    %s214 = sphi 0, %s200
    %s222 = sphi 0, %s224
    %s225 = sphi 0, %s222
    %s226 = sphi 0, %s225
    %s242 = sphi 0, %s226
    %s250 = sphi 0, %s252
    %s253 = sphi 0, %s250
    %s254 = sphi 0, %s253
    %s270 = sphi 0, %s254
  $region4: #{ensemble_forward.2} parent=0 // loop_header_branch
    %19 = sbr.rel (%p17) target = $region8
  $region5: #{ensemble_forward.2} parent=0 // loop_body
    %s21 = ssub.s32 %s16, 1
    %s22 = ssub.s32 %s16, 2
    %s29 = sadd.s32 1, %s24
    %p30 = scmp.ge.s32.totalorder %s29, 1
    %s31 = scalar_select %p30, 0, %s29
    %s32 = sadd.s32 1, %s23
    %s33 = scalar_select %p30, %s32, %s23
    %p34 = scmp.ge.s32.totalorder %s33, 2
    %s35 = scalar_select %p34, 0, %s33
    %s36 = ssub.s32 %s23, %s35
    %s37 = ssub.s32 %s24, %s31
    %s38 = sor.u32 %s36, %s37
    %p39 = scmp.eq.s32.totalorder %s38, 0
    %s41 = sadd.s32 %s40, 1
    %s42 = scalar_select %p39, %s40, %s41
    %p45 = pneg %p39
    %p46 = scmp.eq.s32.totalorder %s16, 1
    %p47 = por %p45, %p46
    %p48 = scmp.ne.s32.totalorder %s40, %s43
    %p49 = scmp.eq.s32.totalorder %s16, 0
    %p50 = por %p48, %p49
    %p51 = scmp.ne.s32.totalorder %s40, %s43
    %p52 = scmp.eq.s32.totalorder %s21, 1
    %p53 = por %p51, %p52
    %p54 = scmp.ne.s32.totalorder %s43, %s44
    %p55 = scmp.eq.s32.totalorder %s21, 0
    %p56 = por %p54, %p55
    %p57 = scmp.ne.s32.totalorder %s43, %s44
    %p58 = scmp.eq.s32.totalorder %s22, 1
    %p59 = por %p57, %p58
    %p61 = scmp.ne.s32.totalorder %s44, %s60
    %p62 = scmp.eq.s32.totalorder %s22, 0
    %p63 = por %p61, %p62
    %s64 = ssub.s32 %s23, %s35
    %s65 = ssub.s32 %s24, %s31
    %s66 = sor.u32 %s64, %s65
    %p67 = scmp.eq.s32.totalorder %s66, 0
    %s69 = sadd.s32 %s68, 1
    %s70 = scalar_select %p67, %s68, %s69
    %p73 = pneg %p67
    %p74 = scmp.eq.s32.totalorder %s16, 1
    %p75 = por %p73, %p74
    %p76 = scmp.ne.s32.totalorder %s68, %s71
    %p77 = scmp.eq.s32.totalorder %s16, 0
    %p78 = por %p76, %p77
    %p79 = scmp.ne.s32.totalorder %s68, %s71
    %p80 = scmp.eq.s32.totalorder %s21, 1
    %p81 = por %p79, %p80
    %p82 = scmp.ne.s32.totalorder %s71, %s72
    %p83 = scmp.eq.s32.totalorder %s21, 0
    %p84 = por %p82, %p83
    %p85 = scmp.ne.s32.totalorder %s71, %s72
    %p86 = scmp.eq.s32.totalorder %s22, 1
    %p87 = por %p85, %p86
    %p89 = scmp.ne.s32.totalorder %s72, %s88
    %p90 = scmp.eq.s32.totalorder %s22, 0
    %p91 = por %p89, %p90
    %s93 = sadd.s32 %s92, 1
    %p96 = scmp.eq.s32.totalorder %s16, 1
    %p97 = scmp.ne.s32.totalorder %s92, %s94
    %p98 = scmp.eq.s32.totalorder %s16, 0
    %p99 = por %p97, %p98
    %p100 = scmp.ne.s32.totalorder %s92, %s94
    %p101 = scmp.eq.s32.totalorder %s21, 1
    %p102 = por %p100, %p101
    %p103 = scmp.ne.s32.totalorder %s94, %s95
    %p104 = scmp.eq.s32.totalorder %s21, 0
    %p105 = por %p103, %p104
    %p106 = scmp.ne.s32.totalorder %s94, %s95
    %p107 = scmp.eq.s32.totalorder %s22, 1
    %p108 = por %p106, %p107
    %p110 = scmp.ne.s32.totalorder %s95, %s109
    %p111 = scmp.eq.s32.totalorder %s22, 0
    %p112 = por %p110, %p111
    %s114 = sadd.s32 %s113, 1
    %p117 = scmp.eq.s32.totalorder %s16, 1
    %p118 = scmp.ne.s32.totalorder %s113, %s115
    %p119 = scmp.eq.s32.totalorder %s16, 0
    %p120 = por %p118, %p119
    %p121 = scmp.ne.s32.totalorder %s113, %s115
    %p122 = scmp.eq.s32.totalorder %s21, 1
    %p123 = por %p121, %p122
    %p124 = scmp.ne.s32.totalorder %s115, %s116
    %p125 = scmp.eq.s32.totalorder %s21, 0
    %p126 = por %p124, %p125
    %p127 = scmp.ne.s32.totalorder %s115, %s116
    %p128 = scmp.eq.s32.totalorder %s22, 1
    %p129 = por %p127, %p128
    %p131 = scmp.ne.s32.totalorder %s116, %s130
    %p132 = scmp.eq.s32.totalorder %s22, 0
    %p133 = por %p131, %p132
    %s135 = sadd.s32 %s134, 1
    %p138 = scmp.eq.s32.totalorder %s16, 1
    %p139 = scmp.ne.s32.totalorder %s134, %s136
    %p140 = scmp.eq.s32.totalorder %s16, 0
    %p141 = por %p139, %p140
    %p142 = scmp.ne.s32.totalorder %s134, %s136
    %p143 = scmp.eq.s32.totalorder %s21, 1
    %p144 = por %p142, %p143
    %p145 = scmp.ne.s32.totalorder %s136, %s137
    %p146 = scmp.eq.s32.totalorder %s21, 0
    %p147 = por %p145, %p146
    %p148 = scmp.ne.s32.totalorder %s136, %s137
    %p149 = scmp.eq.s32.totalorder %s22, 1
    %p150 = por %p148, %p149
    %p152 = scmp.ne.s32.totalorder %s137, %s151
    %p153 = scmp.eq.s32.totalorder %s22, 0
    %p154 = por %p152, %p153
    %s156 = sadd.s32 %s155, 1
    %p159 = scmp.eq.s32.totalorder %s16, 1
    %p160 = scmp.ne.s32.totalorder %s155, %s157
    %p161 = scmp.eq.s32.totalorder %s16, 0
    %p162 = por %p160, %p161
    %p163 = scmp.ne.s32.totalorder %s155, %s157
    %p164 = scmp.eq.s32.totalorder %s21, 1
    %p165 = por %p163, %p164
    %p166 = scmp.ne.s32.totalorder %s157, %s158
    %p167 = scmp.eq.s32.totalorder %s21, 0
    %p168 = por %p166, %p167
    %p169 = scmp.ne.s32.totalorder %s157, %s158
    %p170 = scmp.eq.s32.totalorder %s22, 1
    %p171 = por %p169, %p170
    %p173 = scmp.ne.s32.totalorder %s158, %s172
    %p174 = scmp.eq.s32.totalorder %s22, 0
    %p175 = por %p173, %p174
    %s177 = sadd.s32 %s176, 1
    %p180 = scmp.eq.s32.totalorder %s16, 1
    %p181 = scmp.ne.s32.totalorder %s176, %s178
    %p182 = scmp.eq.s32.totalorder %s16, 0
    %p183 = por %p181, %p182
    %p184 = scmp.ne.s32.totalorder %s176, %s178
    %p185 = scmp.eq.s32.totalorder %s21, 1
    %p186 = por %p184, %p185
    %p187 = scmp.ne.s32.totalorder %s178, %s179
    %p188 = scmp.eq.s32.totalorder %s21, 0
    %p189 = por %p187, %p188
    %p190 = scmp.ne.s32.totalorder %s178, %s179
    %p191 = scmp.eq.s32.totalorder %s22, 1
    %p192 = por %p190, %p191
    %p194 = scmp.ne.s32.totalorder %s179, %s193
    %p195 = scmp.eq.s32.totalorder %s22, 0
    %p196 = por %p194, %p195
    %s198 = sadd.s32 %s197, 1
    %p201 = scmp.eq.s32.totalorder %s16, 1
    %p202 = scmp.ne.s32.totalorder %s197, %s199
    %p203 = scmp.eq.s32.totalorder %s16, 0
    %p204 = por %p202, %p203
    %p205 = scmp.ne.s32.totalorder %s197, %s199
    %p206 = scmp.eq.s32.totalorder %s21, 1
    %p207 = por %p205, %p206
    %p208 = scmp.ne.s32.totalorder %s199, %s200
    %p209 = scmp.eq.s32.totalorder %s21, 0
    %p210 = por %p208, %p209
    %p211 = scmp.ne.s32.totalorder %s199, %s200
    %p212 = scmp.eq.s32.totalorder %s22, 1
    %p213 = por %p211, %p212
    %p215 = scmp.ne.s32.totalorder %s200, %s214
    %p216 = scmp.eq.s32.totalorder %s22, 0
    %p217 = por %p215, %p216
    %s218 = ssub.s32 %s23, %s35
    %s219 = ssub.s32 %s24, %s31
    %s220 = sor.u32 %s218, %s219
    %p221 = scmp.eq.s32.totalorder %s220, 0
    %s223 = sadd.s32 %s222, 1
    %s224 = scalar_select %p221, %s222, %s223
    %p227 = pneg %p221
    %p228 = scmp.eq.s32.totalorder %s16, 1
    %p229 = por %p227, %p228
    %p230 = scmp.ne.s32.totalorder %s222, %s225
    %p231 = scmp.eq.s32.totalorder %s16, 0
    %p232 = por %p230, %p231
    %p233 = scmp.ne.s32.totalorder %s222, %s225
    %p234 = scmp.eq.s32.totalorder %s21, 1
    %p235 = por %p233, %p234
    %p236 = scmp.ne.s32.totalorder %s225, %s226
    %p237 = scmp.eq.s32.totalorder %s21, 0
    %p238 = por %p236, %p237
    %p239 = scmp.ne.s32.totalorder %s225, %s226
    %p240 = scmp.eq.s32.totalorder %s22, 1
    %p241 = por %p239, %p240
    %p243 = scmp.ne.s32.totalorder %s226, %s242
    %p244 = scmp.eq.s32.totalorder %s22, 0
    %p245 = por %p243, %p244
    %s246 = ssub.s32 %s23, %s35
    %s247 = ssub.s32 %s24, %s31
    %s248 = sor.u32 %s246, %s247
    %p249 = scmp.eq.s32.totalorder %s248, 0
    %s251 = sadd.s32 %s250, 1
    %s252 = scalar_select %p249, %s250, %s251
    %p255 = pneg %p249
    %p256 = scmp.eq.s32.totalorder %s16, 1
    %p257 = por %p255, %p256
    %p258 = scmp.ne.s32.totalorder %s250, %s253
    %p259 = scmp.eq.s32.totalorder %s16, 0
    %p260 = por %p258, %p259
    %p261 = scmp.ne.s32.totalorder %s250, %s253
    %p262 = scmp.eq.s32.totalorder %s21, 1
    %p263 = por %p261, %p262
    %p264 = scmp.ne.s32.totalorder %s253, %s254
    %p265 = scmp.eq.s32.totalorder %s21, 0
    %p266 = por %p264, %p265
    %p267 = scmp.ne.s32.totalorder %s253, %s254
    %p268 = scmp.eq.s32.totalorder %s22, 1
    %p269 = por %p267, %p268
    %p271 = scmp.ne.s32.totalorder %s254, %s270
    %p272 = scmp.eq.s32.totalorder %s22, 0
    %p273 = por %p271, %p272
    %p274 = scmp.le.s32.totalorder 1, %s16
    %p275 = scmp.lt.s32.totalorder %s16, 3
    %p276 = pnand %p274, %p275
    %p277 = pneg %p276
    // Predicated region
    $region9: #{ensemble_forward.2} parent=5 // pred_check
      _
    $region10: #{ensemble_forward.2} parent=5 // pred_check_branch
      %279 = sbr.rel (%p276) target = $region12
    $region11: #{ensemble_forward.2} parent=5 // pred_region
      %s280 = ssub.s32 %s16, 1
      // Predicated region
      $region13: #{ensemble_forward.2} parent=11 // pred_check
        %p281 = pneg %p105
      $region14: #{ensemble_forward.2} parent=11 // pred_check_branch
        %283 = sbr.rel (%p281) target = $region16
      $region15: #{ensemble_forward.2} parent=11 // pred_region
        _
      $region16: #{ensemble_forward.2} parent=11 // pred_fallthru
        _
      // Predicated region
      $region17: #{ensemble_forward.2} parent=11 // pred_check
        %p284 = pneg %p126
      $region18: #{ensemble_forward.2} parent=11 // pred_check_branch
        %286 = sbr.rel (%p284) target = $region20
      $region19: #{ensemble_forward.2} parent=11 // pred_region
        _
      $region20: #{ensemble_forward.2} parent=11 // pred_fallthru
        _
      // Predicated region
      $region21: #{ensemble_forward.2} parent=11 // pred_check
        %p287 = pneg %p147
      $region22: #{ensemble_forward.2} parent=11 // pred_check_branch
        %289 = sbr.rel (%p287) target = $region24
      $region23: #{ensemble_forward.2} parent=11 // pred_region
        _
      $region24: #{ensemble_forward.2} parent=11 // pred_fallthru
        _
      // Predicated region
      $region25: #{ensemble_forward.2} parent=11 // pred_check
        %p290 = pneg %p168
      $region26: #{ensemble_forward.2} parent=11 // pred_check_branch
        %292 = sbr.rel (%p290) target = $region28
      $region27: #{ensemble_forward.2} parent=11 // pred_region
        _
      $region28: #{ensemble_forward.2} parent=11 // pred_fallthru
        _
      // Predicated region
      $region29: #{ensemble_forward.2} parent=11 // pred_check
        %p293 = pneg %p189
      $region30: #{ensemble_forward.2} parent=11 // pred_check_branch
        %295 = sbr.rel (%p293) target = $region32
      $region31: #{ensemble_forward.2} parent=11 // pred_region
        _
      $region32: #{ensemble_forward.2} parent=11 // pred_fallthru
        _
      // Predicated region
      $region33: #{ensemble_forward.2} parent=11 // pred_check
        %p296 = pneg %p210
      $region34: #{ensemble_forward.2} parent=11 // pred_check_branch
        %298 = sbr.rel (%p296) target = $region36
      $region35: #{ensemble_forward.2} parent=11 // pred_region
        _
      $region36: #{ensemble_forward.2} parent=11 // pred_fallthru
        _
    $region12: #{ensemble_forward.2} parent=5 // pred_fallthru
      _
    %p299 = scmp.lt.s32.totalorder %s16, 2
    // Predicated region
    $region37: #{ensemble_forward.2} parent=5 // pred_check
      %p300 = pneg %p299
    $region38: #{ensemble_forward.2} parent=5 // pred_check_branch
      %302 = sbr.rel (%p300) target = $region40
    $region39: #{ensemble_forward.2} parent=5 // pred_region
      // Predicated region
      $region41: #{ensemble_forward.2} parent=39 // pred_check
        %p303 = pneg %p50
      $region42: #{ensemble_forward.2} parent=39 // pred_check_branch
        %305 = sbr.rel (%p303) target = $region44
      $region43: #{ensemble_forward.2} parent=39 // pred_region
        %s306 = smul.u32 8, %s24
        %p307 = scmp.lt.s32.totalorder %s23, 1
        %s308 = scalar_select %p307, %s23, 1
        %p309 = scmp.lt.s32.totalorder %s306, 7
        %s310 = scalar_select %p309, %s306, 7
        %s311 = smul.addr %s308, 8
        %s312 = sadd.s32 %s310, %s311
        %s313 = smul.addr %s312, 4
        %s314 = scalar_lea.vmem %s0, %s313
        %s315 = smul.u32 8, %s24
      $region44: #{ensemble_forward.2} parent=39 // pred_fallthru
        _
      // Predicated region
      $region45: #{ensemble_forward.2} parent=39 // pred_check
        %p316 = pneg %p78
      $region46: #{ensemble_forward.2} parent=39 // pred_check_branch
        %318 = sbr.rel (%p316) target = $region48
      $region47: #{ensemble_forward.2} parent=39 // pred_region
        %s319 = smul.u32 8, %s24
        %p320 = scmp.lt.s32.totalorder %s23, 1
        %s321 = scalar_select %p320, %s23, 1
        %p322 = scmp.lt.s32.totalorder %s319, 7
        %s323 = scalar_select %p322, %s319, 7
        %s324 = smul.addr %s321, 8
        %s325 = sadd.s32 %s323, %s324
        %s326 = smul.addr %s325, 4
        %s327 = scalar_lea.vmem %s1, %s326
        %s328 = smul.u32 8, %s24
      $region48: #{ensemble_forward.2} parent=39 // pred_fallthru
        _
    $region40: #{ensemble_forward.2} parent=5 // pred_fallthru
      _
    %p329 = scmp.le.s32.totalorder 1, %s16
    %p330 = scmp.lt.s32.totalorder %s16, 3
    %p331 = pnand %p329, %p330
    %p332 = pneg %p331
    // Predicated region
    $region49: #{ensemble_forward.2} parent=5 // pred_check
      _
    $region50: #{ensemble_forward.2} parent=5 // pred_check_branch
      %334 = sbr.rel (%p331) target = $region52
    $region51: #{ensemble_forward.2} parent=5 // pred_region
      %s335 = ssub.s32 %s16, 1
      %s336 = smul.u32 8, %s26
      %p337 = scmp.lt.s32.totalorder %s25, 1
      %s338 = scalar_select %p337, %s25, 1
      %p339 = scmp.lt.s32.totalorder %s336, 7
      %s340 = scalar_select %p339, %s336, 7
      %s341 = smul.addr %s338, 8
      %s342 = sadd.s32 %s340, %s341
      %s343 = smul.addr %s342, 4
      %s344 = scalar_lea.vmem %s0, %s343
      %p345 = pneg %p56
      %p346 = pneg %p53
      %s347 = smul.u32 8, %s26
      %p348 = scmp.lt.s32.totalorder %s25, 1
      %s349 = scalar_select %p348, %s25, 1
      %p350 = scmp.lt.s32.totalorder %s347, 7
      %s351 = scalar_select %p350, %s347, 7
      %s352 = smul.addr %s349, 8
      %s353 = sadd.s32 %s351, %s352
      %s354 = smul.addr %s353, 4
      %s355 = scalar_lea.vmem %s1, %s354
      %p356 = pneg %p84
      %p357 = pneg %p81
      %p358 = pneg %p105
      %p359 = pneg %p102
      %p360 = pneg %p126
      %p361 = pneg %p123
      %p362 = pneg %p147
      %p363 = pneg %p144
      %p364 = pneg %p168
      %p365 = pneg %p165
      %p366 = pneg %p189
      %p367 = pneg %p186
      %p368 = pneg %p210
      %p369 = pneg %p207
      %p370 = pneg %p238
      %p371 = pneg %p235
      %s372 = smul.u32 8, %s26
      %p373 = scmp.lt.s32.totalorder %s25, 1
      %s374 = scalar_select %p373, %s25, 1
      %p375 = scmp.lt.s32.totalorder %s372, 7
      %s376 = scalar_select %p375, %s372, 7
      %s377 = smul.addr %s374, 8
      %s378 = sadd.s32 %s376, %s377
      %s379 = smul.addr %s378, 8
      %s380 = scalar_lea.vmem %s8, %s379
      %p381 = pneg %p266
      %p382 = pneg %p263
      %s383 = smul.u32 8, %s26
      %p384 = scmp.lt.s32.totalorder %s25, 1
      %s385 = scalar_select %p384, %s25, 1
      %p386 = scmp.lt.s32.totalorder %s383, 7
      %s387 = scalar_select %p386, %s383, 7
      %s388 = smul.addr %s385, 8
      %s389 = sadd.s32 %s387, %s388
      %s390 = smul.addr %s389, 8
      %s391 = scalar_lea.vmem %s9, %s390
      %s392 = smul.u32 8, %s26
      %p393 = scmp.lt.s32.totalorder %s25, 1
      %s394 = scalar_select %p393, %s25, 1
      %p395 = scmp.lt.s32.totalorder %s392, 7
      %s396 = scalar_select %p395, %s392, 7
      %s397 = smul.addr %s394, 8
      %s398 = sadd.s32 %s396, %s397
      %s399 = smul.addr %s398, 4
      %s400 = scalar_lea.vmem %s0, %s399
      %s401 = smul.u32 8, %s26
      %s402 = smul.u32 8, %s26
      %p403 = scmp.lt.s32.totalorder %s25, 1
      %s404 = scalar_select %p403, %s25, 1
      %p405 = scmp.lt.s32.totalorder %s402, 7
      %s406 = scalar_select %p405, %s402, 7
      %s407 = smul.addr %s404, 8
      %s408 = sadd.s32 %s406, %s407
      %s409 = smul.addr %s408, 4
      %s410 = scalar_lea.vmem %s1, %s409
      %s411 = smul.u32 8, %s26
      %s412 = smul.u32 8, %s26
      %p413 = scmp.lt.s32.totalorder %s25, 1
      %s414 = scalar_select %p413, %s25, 1
      %p415 = scmp.lt.s32.totalorder %s412, 7
      %s416 = scalar_select %p415, %s412, 7
      %s417 = smul.addr %s414, 8
      %s418 = sadd.s32 %s416, %s417
      %s419 = smul.addr %s418, 8
      %s420 = scalar_lea.vmem %s8, %s419
      %s421 = smul.u32 8, %s26
      %s422 = smul.u32 8, %s26
      %p423 = scmp.lt.s32.totalorder %s25, 1
      %s424 = scalar_select %p423, %s25, 1
      %p425 = scmp.lt.s32.totalorder %s422, 7
      %s426 = scalar_select %p425, %s422, 7
      %s427 = smul.addr %s424, 8
      %s428 = sadd.s32 %s426, %s427
      %s429 = smul.addr %s428, 8
      %s430 = scalar_lea.vmem %s9, %s429
      %s431 = smul.u32 8, %s26
      %v432 = vld [vmem:[%s400] sm:$0xff]
      %v433 = vld [vmem:[%s400 + $0x8] sm:$0xff]
      %v434 = vld [vmem:[%s400 + $0x10] sm:$0xff]
      %v435 = vld [vmem:[%s400 + $0x18] sm:$0xff]
      %v436 = vld [vmem:[%s410] sm:$0xff]
      %v437 = vld [vmem:[%s410 + $0x8] sm:$0xff]
      %v438 = vld [vmem:[%s410 + $0x10] sm:$0xff]
      %v439 = vld [vmem:[%s410 + $0x18] sm:$0xff]
      %v440 = vld [vmem:[%s2] sm:$0x3f]
      %v441 = vld [vmem:[%s3] sm:$0x3f]
      %v446 = vcombine.high %v436, %v436
      %v447 = vcombine.high %v437, %v437
      %v448 = vcombine.high %v438, %v438
      %v449 = vcombine.high %v439, %v439
      %vm450 = vcmask 31744
      %v452 = vsel %vm450, %v441, 0
      %vm454 = vcmask 1043456
      %v455 = vsel %vm454, %v436, 0
      %v457 = vsel %vm454, %v446, 0
      %v459 = vsel %vm454, %v437, 0
      %v461 = vsel %vm454, %v447, 0
      %v463 = vsel %vm454, %v438, 0
      %v465 = vsel %vm454, %v448, 0
      %v467 = vsel %vm454, %v439, 0
      %v469 = vsel %vm454, %v449, 0
      %471 = vmatprep.subr.mxu0 %v457
      %472 = vmatpush1.msra.mxu0 %v455
      %473 = vmatprep.subr.mxu0 0.0
      %474 = vmatpush1.msra.mxu0 0.0
      %475 = vmatprep.subr.mxu0 0.0
      %476 = vmatpush1.msra.mxu0 0.0
      %477 = vmatprep.subr.mxu0 0.0
      %478 = vmatpush1.msra.mxu0 0.0
      %479 = vmatprep.subr.mxu0 0.0
      %480 = vmatpush1.msra.mxu0 0.0
      %481 = vmatprep.subr.mxu0 0.0
      %482 = vmatpush1.msra.mxu0 0.0
      %483 = vmatprep.subr.mxu0 0.0
      %484 = vmatpush1.msra.mxu0 0.0
      %485 = vmatprep.subr.mxu0 0.0
      %486 = vmatpush1.msra.mxu0 0.0
      %487 = vmatprep.subr.mxu0 0.0
      %488 = vmatpush1.msra.mxu0 0.0
      %489 = vmatprep.subr.mxu0 0.0
      %490 = vmatpush1.msra.mxu0 0.0
      %491 = vmatprep.subr.mxu0 0.0
      %492 = vmatpush1.msra.mxu0 0.0
      %493 = vmatprep.subr.mxu0 0.0
      %494 = vmatpush1.msra.mxu0 0.0
      %495 = vmatprep.subr.mxu0 0.0
      %496 = vmatpush1.msra.mxu0 0.0
      %497 = vmatprep.subr.mxu0 0.0
      %498 = vmatpush1.msra.mxu0 0.0
      %499 = vmatprep.subr.mxu0 0.0
      %500 = vmatpush1.msra.mxu0 0.0
      %501 = vmatprep.subr.mxu0 0.0
      %502 = vmatpush1.msra.mxu0 0.0
      %503 = vmatprep.subr.mxu0 0.0
      %504 = vmatpush1.msra.mxu0 0.0
      %505 = vmatprep.subr.mxu0 0.0
      %506 = vmatpush1.msra.mxu0 0.0
      %507 = vmatprep.subr.mxu0 0.0
      %508 = vmatpush1.msra.mxu0 0.0
      %509 = vmatprep.subr.mxu0 0.0
      %510 = vmatpush1.msra.mxu0 0.0
      %511 = vmatprep.subr.mxu0 0.0
      %512 = vmatpush1.msra.mxu0 0.0
      %513 = vmatprep.subr.mxu0 0.0
      %514 = vmatpush1.msra.mxu0 0.0
      %515 = vmatprep.subr.mxu0 0.0
      %516 = vmatpush1.msra.mxu0 0.0
      %517 = vmatprep.subr.mxu0 0.0
      %518 = vmatpush1.msra.mxu0 0.0
      %519 = vmatprep.subr.mxu0 0.0
      %520 = vmatpush1.msra.mxu0 0.0
      %521 = vmatprep.subr.mxu0 0.0
      %522 = vmatpush1.msra.mxu0 0.0
      %523 = vmatprep.subr.mxu0 0.0
      %524 = vmatpush1.msra.mxu0 0.0
      %525 = vmatprep.subr.mxu0 0.0
      %526 = vmatpush1.msra.mxu0 0.0
      %527 = vmatprep.subr.mxu0 0.0
      %528 = vmatpush1.msra.mxu0 0.0
      %529 = vmatprep.subr.mxu0 0.0
      %530 = vmatpush1.msra.mxu0 0.0
      %531 = vmatprep.subr.mxu0 0.0
      %532 = vmatpush1.msra.mxu0 0.0
      %533 = vmatprep.subr.mxu0 0.0
      %534 = vmatpush1.msra.mxu0 0.0
      %535 = vmatprep.mubr.f32.mxu0 0.0
      %536 = vmatmul.mubr.f32.gmra.mrb[0].mxu0 %v452
      %v537 = vpop.f32.mrb[0].mxu0
      %v538 = vadd.f32 0.0, %v537
      %v539 = vpop.f32.mrb[0].mxu0
      %v540 = vadd.f32 0.0, %v539
      %541 = vdwg.mxu0
      %542 = vmatprep.subr.mxu0 %v461
      %543 = vmatpush1.msra.mxu0 %v459
      %544 = vmatprep.subr.mxu0 0.0
      %545 = vmatpush1.msra.mxu0 0.0
      %546 = vmatprep.subr.mxu0 0.0
      %547 = vmatpush1.msra.mxu0 0.0
      %548 = vmatprep.subr.mxu0 0.0
      %549 = vmatpush1.msra.mxu0 0.0
      %550 = vmatprep.subr.mxu0 0.0
      %551 = vmatpush1.msra.mxu0 0.0
      %552 = vmatprep.subr.mxu0 0.0
      %553 = vmatpush1.msra.mxu0 0.0
      %554 = vmatprep.subr.mxu0 0.0
      %555 = vmatpush1.msra.mxu0 0.0
      %556 = vmatprep.subr.mxu0 0.0
      %557 = vmatpush1.msra.mxu0 0.0
      %558 = vmatprep.subr.mxu0 0.0
      %559 = vmatpush1.msra.mxu0 0.0
      %560 = vmatprep.subr.mxu0 0.0
      %561 = vmatpush1.msra.mxu0 0.0
      %562 = vmatprep.subr.mxu0 0.0
      %563 = vmatpush1.msra.mxu0 0.0
      %564 = vmatprep.subr.mxu0 0.0
      %565 = vmatpush1.msra.mxu0 0.0
      %566 = vmatprep.subr.mxu0 0.0
      %567 = vmatpush1.msra.mxu0 0.0
      %568 = vmatprep.subr.mxu0 0.0
      %569 = vmatpush1.msra.mxu0 0.0
      %570 = vmatprep.subr.mxu0 0.0
      %571 = vmatpush1.msra.mxu0 0.0
      %572 = vmatprep.subr.mxu0 0.0
      %573 = vmatpush1.msra.mxu0 0.0
      %574 = vmatprep.subr.mxu0 0.0
      %575 = vmatpush1.msra.mxu0 0.0
      %576 = vmatprep.subr.mxu0 0.0
      %577 = vmatpush1.msra.mxu0 0.0
      %578 = vmatprep.subr.mxu0 0.0
      %579 = vmatpush1.msra.mxu0 0.0
      %580 = vmatprep.subr.mxu0 0.0
      %581 = vmatpush1.msra.mxu0 0.0
      %582 = vmatprep.subr.mxu0 0.0
      %583 = vmatpush1.msra.mxu0 0.0
      %584 = vmatprep.subr.mxu0 0.0
      %585 = vmatpush1.msra.mxu0 0.0
      %586 = vmatprep.subr.mxu0 0.0
      %587 = vmatpush1.msra.mxu0 0.0
      %588 = vmatprep.subr.mxu0 0.0
      %589 = vmatpush1.msra.mxu0 0.0
      %590 = vmatprep.subr.mxu0 0.0
      %591 = vmatpush1.msra.mxu0 0.0
      %592 = vmatprep.subr.mxu0 0.0
      %593 = vmatpush1.msra.mxu0 0.0
      %594 = vmatprep.subr.mxu0 0.0
      %595 = vmatpush1.msra.mxu0 0.0
      %596 = vmatprep.subr.mxu0 0.0
      %597 = vmatpush1.msra.mxu0 0.0
      %598 = vmatprep.subr.mxu0 0.0
      %599 = vmatpush1.msra.mxu0 0.0
      %600 = vmatprep.subr.mxu0 0.0
      %601 = vmatpush1.msra.mxu0 0.0
      %602 = vmatprep.subr.mxu0 0.0
      %603 = vmatpush1.msra.mxu0 0.0
      %604 = vmatprep.subr.mxu0 0.0
      %605 = vmatpush1.msra.mxu0 0.0
      %606 = vmatprep.mubr.f32.mxu0 0.0
      %607 = vmatmul.mubr.f32.gmra.mrb[0].mxu0 %v452
      %v608 = vpop.f32.mrb[0].mxu0
      %v609 = vadd.f32 0.0, %v608
      %v610 = vpop.f32.mrb[0].mxu0
      %v611 = vadd.f32 0.0, %v610
      %612 = vdwg.mxu0
      %613 = vmatprep.subr.mxu0 %v465
      %614 = vmatpush1.msra.mxu0 %v463
      %615 = vmatprep.subr.mxu0 0.0
      %616 = vmatpush1.msra.mxu0 0.0
      %617 = vmatprep.subr.mxu0 0.0
      %618 = vmatpush1.msra.mxu0 0.0
      %619 = vmatprep.subr.mxu0 0.0
      %620 = vmatpush1.msra.mxu0 0.0
      %621 = vmatprep.subr.mxu0 0.0
      %622 = vmatpush1.msra.mxu0 0.0
      %623 = vmatprep.subr.mxu0 0.0
      %624 = vmatpush1.msra.mxu0 0.0
      %625 = vmatprep.subr.mxu0 0.0
      %626 = vmatpush1.msra.mxu0 0.0
      %627 = vmatprep.subr.mxu0 0.0
      %628 = vmatpush1.msra.mxu0 0.0
      %629 = vmatprep.subr.mxu0 0.0
      %630 = vmatpush1.msra.mxu0 0.0
      %631 = vmatprep.subr.mxu0 0.0
      %632 = vmatpush1.msra.mxu0 0.0
      %633 = vmatprep.subr.mxu0 0.0
      %634 = vmatpush1.msra.mxu0 0.0
      %635 = vmatprep.subr.mxu0 0.0
      %636 = vmatpush1.msra.mxu0 0.0
      %637 = vmatprep.subr.mxu0 0.0
      %638 = vmatpush1.msra.mxu0 0.0
      %639 = vmatprep.subr.mxu0 0.0
      %640 = vmatpush1.msra.mxu0 0.0
      %641 = vmatprep.subr.mxu0 0.0
      %642 = vmatpush1.msra.mxu0 0.0
      %643 = vmatprep.subr.mxu0 0.0
      %644 = vmatpush1.msra.mxu0 0.0
      %645 = vmatprep.subr.mxu0 0.0
      %646 = vmatpush1.msra.mxu0 0.0
      %647 = vmatprep.subr.mxu0 0.0
      %648 = vmatpush1.msra.mxu0 0.0
      %649 = vmatprep.subr.mxu0 0.0
      %650 = vmatpush1.msra.mxu0 0.0
      %651 = vmatprep.subr.mxu0 0.0
      %652 = vmatpush1.msra.mxu0 0.0
      %653 = vmatprep.subr.mxu0 0.0
      %654 = vmatpush1.msra.mxu0 0.0
      %655 = vmatprep.subr.mxu0 0.0
      %656 = vmatpush1.msra.mxu0 0.0
      %657 = vmatprep.subr.mxu0 0.0
      %658 = vmatpush1.msra.mxu0 0.0
      %659 = vmatprep.subr.mxu0 0.0
      %660 = vmatpush1.msra.mxu0 0.0
      %661 = vmatprep.subr.mxu0 0.0
      %662 = vmatpush1.msra.mxu0 0.0
      %663 = vmatprep.subr.mxu0 0.0
      %664 = vmatpush1.msra.mxu0 0.0
      %665 = vmatprep.subr.mxu0 0.0
      %666 = vmatpush1.msra.mxu0 0.0
      %667 = vmatprep.subr.mxu0 0.0
      %668 = vmatpush1.msra.mxu0 0.0
      %669 = vmatprep.subr.mxu0 0.0
      %670 = vmatpush1.msra.mxu0 0.0
      %671 = vmatprep.subr.mxu0 0.0
      %672 = vmatpush1.msra.mxu0 0.0
      %673 = vmatprep.subr.mxu0 0.0
      %674 = vmatpush1.msra.mxu0 0.0
      %675 = vmatprep.subr.mxu0 0.0
      %676 = vmatpush1.msra.mxu0 0.0
      %677 = vmatprep.mubr.f32.mxu0 0.0
      %678 = vmatmul.mubr.f32.gmra.mrb[0].mxu0 %v452
      %v679 = vpop.f32.mrb[0].mxu0
      %v680 = vadd.f32 0.0, %v679
      %v681 = vpop.f32.mrb[0].mxu0
      %v682 = vadd.f32 0.0, %v681
      %683 = vdwg.mxu0
      %684 = vmatprep.subr.mxu0 %v469
      %685 = vmatpush1.msra.mxu0 %v467
      %686 = vmatprep.subr.mxu0 0.0
      %687 = vmatpush1.msra.mxu0 0.0
      %688 = vmatprep.subr.mxu0 0.0
      %689 = vmatpush1.msra.mxu0 0.0
      %690 = vmatprep.subr.mxu0 0.0
      %691 = vmatpush1.msra.mxu0 0.0
      %692 = vmatprep.subr.mxu0 0.0
      %693 = vmatpush1.msra.mxu0 0.0
      %694 = vmatprep.subr.mxu0 0.0
      %695 = vmatpush1.msra.mxu0 0.0
      %696 = vmatprep.subr.mxu0 0.0
      %697 = vmatpush1.msra.mxu0 0.0
      %698 = vmatprep.subr.mxu0 0.0
      %699 = vmatpush1.msra.mxu0 0.0
      %700 = vmatprep.subr.mxu0 0.0
      %701 = vmatpush1.msra.mxu0 0.0
      %702 = vmatprep.subr.mxu0 0.0
      %703 = vmatpush1.msra.mxu0 0.0
      %704 = vmatprep.subr.mxu0 0.0
      %705 = vmatpush1.msra.mxu0 0.0
      %706 = vmatprep.subr.mxu0 0.0
      %707 = vmatpush1.msra.mxu0 0.0
      %708 = vmatprep.subr.mxu0 0.0
      %709 = vmatpush1.msra.mxu0 0.0
      %710 = vmatprep.subr.mxu0 0.0
      %711 = vmatpush1.msra.mxu0 0.0
      %712 = vmatprep.subr.mxu0 0.0
      %713 = vmatpush1.msra.mxu0 0.0
      %714 = vmatprep.subr.mxu0 0.0
      %715 = vmatpush1.msra.mxu0 0.0
      %716 = vmatprep.subr.mxu0 0.0
      %717 = vmatpush1.msra.mxu0 0.0
      %718 = vmatprep.subr.mxu0 0.0
      %719 = vmatpush1.msra.mxu0 0.0
      %720 = vmatprep.subr.mxu0 0.0
      %721 = vmatpush1.msra.mxu0 0.0
      %722 = vmatprep.subr.mxu0 0.0
      %723 = vmatpush1.msra.mxu0 0.0
      %724 = vmatprep.subr.mxu0 0.0
      %725 = vmatpush1.msra.mxu0 0.0
      %726 = vmatprep.subr.mxu0 0.0
      %727 = vmatpush1.msra.mxu0 0.0
      %728 = vmatprep.subr.mxu0 0.0
      %729 = vmatpush1.msra.mxu0 0.0
      %730 = vmatprep.subr.mxu0 0.0
      %731 = vmatpush1.msra.mxu0 0.0
      %732 = vmatprep.subr.mxu0 0.0
      %733 = vmatpush1.msra.mxu0 0.0
      %734 = vmatprep.subr.mxu0 0.0
      %735 = vmatpush1.msra.mxu0 0.0
      %736 = vmatprep.subr.mxu0 0.0
      %737 = vmatpush1.msra.mxu0 0.0
      %738 = vmatprep.subr.mxu0 0.0
      %739 = vmatpush1.msra.mxu0 0.0
      %740 = vmatprep.subr.mxu0 0.0
      %741 = vmatpush1.msra.mxu0 0.0
      %742 = vmatprep.subr.mxu0 0.0
      %743 = vmatpush1.msra.mxu0 0.0
      %744 = vmatprep.subr.mxu0 0.0
      %745 = vmatpush1.msra.mxu0 0.0
      %746 = vmatprep.subr.mxu0 0.0
      %747 = vmatpush1.msra.mxu0 0.0
      %748 = vmatprep.mubr.f32.mxu0 0.0
      %749 = vmatmul.mubr.f32.gmra.mrb[0].mxu0 %v452
      %v750 = vpop.f32.mrb[0].mxu0
      %v751 = vadd.f32 0.0, %v750
      %v752 = vpop.f32.mrb[0].mxu0
      %v753 = vadd.f32 0.0, %v752
      %754 = vdwg.mxu0
      %v759 = vcombine.high %v432, %v432
      %v760 = vcombine.high %v433, %v433
      %v761 = vcombine.high %v434, %v434
      %v762 = vcombine.high %v435, %v435
      %v764 = vsel %vm450, %v440, 0
      %v766 = vsel %vm454, %v432, 0
      %v768 = vsel %vm454, %v759, 0
      %v770 = vsel %vm454, %v433, 0
      %v772 = vsel %vm454, %v760, 0
      %v774 = vsel %vm454, %v434, 0
      %v776 = vsel %vm454, %v761, 0
      %v778 = vsel %vm454, %v435, 0
      %v780 = vsel %vm454, %v762, 0
      %782 = vmatprep.subr.mxu0 %v768
      %783 = vmatpush1.msra.mxu0 %v766
      %784 = vmatprep.subr.mxu0 0.0
      %785 = vmatpush1.msra.mxu0 0.0
      %786 = vmatprep.subr.mxu0 0.0
      %787 = vmatpush1.msra.mxu0 0.0
      %788 = vmatprep.subr.mxu0 0.0
      %789 = vmatpush1.msra.mxu0 0.0
      %790 = vmatprep.subr.mxu0 0.0
      %791 = vmatpush1.msra.mxu0 0.0
      %792 = vmatprep.subr.mxu0 0.0
      %793 = vmatpush1.msra.mxu0 0.0
      %794 = vmatprep.subr.mxu0 0.0
      %795 = vmatpush1.msra.mxu0 0.0
      %796 = vmatprep.subr.mxu0 0.0
      %797 = vmatpush1.msra.mxu0 0.0
      %798 = vmatprep.subr.mxu0 0.0
      %799 = vmatpush1.msra.mxu0 0.0
      %800 = vmatprep.subr.mxu0 0.0
      %801 = vmatpush1.msra.mxu0 0.0
      %802 = vmatprep.subr.mxu0 0.0
      %803 = vmatpush1.msra.mxu0 0.0
      %804 = vmatprep.subr.mxu0 0.0
      %805 = vmatpush1.msra.mxu0 0.0
      %806 = vmatprep.subr.mxu0 0.0
      %807 = vmatpush1.msra.mxu0 0.0
      %808 = vmatprep.subr.mxu0 0.0
      %809 = vmatpush1.msra.mxu0 0.0
      %810 = vmatprep.subr.mxu0 0.0
      %811 = vmatpush1.msra.mxu0 0.0
      %812 = vmatprep.subr.mxu0 0.0
      %813 = vmatpush1.msra.mxu0 0.0
      %814 = vmatprep.subr.mxu0 0.0
      %815 = vmatpush1.msra.mxu0 0.0
      %816 = vmatprep.subr.mxu0 0.0
      %817 = vmatpush1.msra.mxu0 0.0
      %818 = vmatprep.subr.mxu0 0.0
      %819 = vmatpush1.msra.mxu0 0.0
      %820 = vmatprep.subr.mxu0 0.0
      %821 = vmatpush1.msra.mxu0 0.0
      %822 = vmatprep.subr.mxu0 0.0
      %823 = vmatpush1.msra.mxu0 0.0
      %824 = vmatprep.subr.mxu0 0.0
      %825 = vmatpush1.msra.mxu0 0.0
      %826 = vmatprep.subr.mxu0 0.0
      %827 = vmatpush1.msra.mxu0 0.0
      %828 = vmatprep.subr.mxu0 0.0
      %829 = vmatpush1.msra.mxu0 0.0
      %830 = vmatprep.subr.mxu0 0.0
      %831 = vmatpush1.msra.mxu0 0.0
      %832 = vmatprep.subr.mxu0 0.0
      %833 = vmatpush1.msra.mxu0 0.0
      %834 = vmatprep.subr.mxu0 0.0
      %835 = vmatpush1.msra.mxu0 0.0
      %836 = vmatprep.subr.mxu0 0.0
      %837 = vmatpush1.msra.mxu0 0.0
      %838 = vmatprep.subr.mxu0 0.0
      %839 = vmatpush1.msra.mxu0 0.0
      %840 = vmatprep.subr.mxu0 0.0
      %841 = vmatpush1.msra.mxu0 0.0
      %842 = vmatprep.subr.mxu0 0.0
      %843 = vmatpush1.msra.mxu0 0.0
      %844 = vmatprep.subr.mxu0 0.0
      %845 = vmatpush1.msra.mxu0 0.0
      %846 = vmatprep.mubr.f32.mxu0 0.0
      %847 = vmatmul.mubr.f32.gmra.mrb[0].mxu0 %v764
      %v848 = vpop.f32.mrb[0].mxu0
      %v849 = vadd.f32 %v538, %v848
      %v850 = vpop.f32.mrb[0].mxu0
      %v851 = vadd.f32 %v540, %v850
      %852 = vdwg.mxu0
      %853 = vmatprep.subr.mxu0 %v772
      %854 = vmatpush1.msra.mxu0 %v770
      %855 = vmatprep.subr.mxu0 0.0
      %856 = vmatpush1.msra.mxu0 0.0
      %857 = vmatprep.subr.mxu0 0.0
      %858 = vmatpush1.msra.mxu0 0.0
      %859 = vmatprep.subr.mxu0 0.0
      %860 = vmatpush1.msra.mxu0 0.0
      %861 = vmatprep.subr.mxu0 0.0
      %862 = vmatpush1.msra.mxu0 0.0
      %863 = vmatprep.subr.mxu0 0.0
      %864 = vmatpush1.msra.mxu0 0.0
      %865 = vmatprep.subr.mxu0 0.0
      %866 = vmatpush1.msra.mxu0 0.0
      %867 = vmatprep.subr.mxu0 0.0
      %868 = vmatpush1.msra.mxu0 0.0
      %869 = vmatprep.subr.mxu0 0.0
      %870 = vmatpush1.msra.mxu0 0.0
      %871 = vmatprep.subr.mxu0 0.0
      %872 = vmatpush1.msra.mxu0 0.0
      %873 = vmatprep.subr.mxu0 0.0
      %874 = vmatpush1.msra.mxu0 0.0
      %875 = vmatprep.subr.mxu0 0.0
      %876 = vmatpush1.msra.mxu0 0.0
      %877 = vmatprep.subr.mxu0 0.0
      %878 = vmatpush1.msra.mxu0 0.0
      %879 = vmatprep.subr.mxu0 0.0
      %880 = vmatpush1.msra.mxu0 0.0
      %881 = vmatprep.subr.mxu0 0.0
      %882 = vmatpush1.msra.mxu0 0.0
      %883 = vmatprep.subr.mxu0 0.0
      %884 = vmatpush1.msra.mxu0 0.0
      %885 = vmatprep.subr.mxu0 0.0
      %886 = vmatpush1.msra.mxu0 0.0
      %887 = vmatprep.subr.mxu0 0.0
      %888 = vmatpush1.msra.mxu0 0.0
      %889 = vmatprep.subr.mxu0 0.0
      %890 = vmatpush1.msra.mxu0 0.0
      %891 = vmatprep.subr.mxu0 0.0
      %892 = vmatpush1.msra.mxu0 0.0
      %893 = vmatprep.subr.mxu0 0.0
      %894 = vmatpush1.msra.mxu0 0.0
      %895 = vmatprep.subr.mxu0 0.0
      %896 = vmatpush1.msra.mxu0 0.0
      %897 = vmatprep.subr.mxu0 0.0
      %898 = vmatpush1.msra.mxu0 0.0
      %899 = vmatprep.subr.mxu0 0.0
      %900 = vmatpush1.msra.mxu0 0.0
      %901 = vmatprep.subr.mxu0 0.0
      %902 = vmatpush1.msra.mxu0 0.0
      %903 = vmatprep.subr.mxu0 0.0
      %904 = vmatpush1.msra.mxu0 0.0
      %905 = vmatprep.subr.mxu0 0.0
      %906 = vmatpush1.msra.mxu0 0.0
      %907 = vmatprep.subr.mxu0 0.0
      %908 = vmatpush1.msra.mxu0 0.0
      %909 = vmatprep.subr.mxu0 0.0
      %910 = vmatpush1.msra.mxu0 0.0
      %911 = vmatprep.subr.mxu0 0.0
      %912 = vmatpush1.msra.mxu0 0.0
      %913 = vmatprep.subr.mxu0 0.0
      %914 = vmatpush1.msra.mxu0 0.0
      %915 = vmatprep.subr.mxu0 0.0
      %916 = vmatpush1.msra.mxu0 0.0
      %917 = vmatprep.mubr.f32.mxu0 0.0
      %918 = vmatmul.mubr.f32.gmra.mrb[0].mxu0 %v764
      %v919 = vpop.f32.mrb[0].mxu0
      %v920 = vadd.f32 %v609, %v919
      %v921 = vpop.f32.mrb[0].mxu0
      %v922 = vadd.f32 %v611, %v921
      %923 = vdwg.mxu0
      %924 = vmatprep.subr.mxu0 %v776
      %925 = vmatpush1.msra.mxu0 %v774
      %926 = vmatprep.subr.mxu0 0.0
      %927 = vmatpush1.msra.mxu0 0.0
      %928 = vmatprep.subr.mxu0 0.0
      %929 = vmatpush1.msra.mxu0 0.0
      %930 = vmatprep.subr.mxu0 0.0
      %931 = vmatpush1.msra.mxu0 0.0
      %932 = vmatprep.subr.mxu0 0.0
      %933 = vmatpush1.msra.mxu0 0.0
      %934 = vmatprep.subr.mxu0 0.0
      %935 = vmatpush1.msra.mxu0 0.0
      %936 = vmatprep.subr.mxu0 0.0
      %937 = vmatpush1.msra.mxu0 0.0
      %938 = vmatprep.subr.mxu0 0.0
      %939 = vmatpush1.msra.mxu0 0.0
      %940 = vmatprep.subr.mxu0 0.0
      %941 = vmatpush1.msra.mxu0 0.0
      %942 = vmatprep.subr.mxu0 0.0
      %943 = vmatpush1.msra.mxu0 0.0
      %944 = vmatprep.subr.mxu0 0.0
      %945 = vmatpush1.msra.mxu0 0.0
      %946 = vmatprep.subr.mxu0 0.0
      %947 = vmatpush1.msra.mxu0 0.0
      %948 = vmatprep.subr.mxu0 0.0
      %949 = vmatpush1.msra.mxu0 0.0
      %950 = vmatprep.subr.mxu0 0.0
      %951 = vmatpush1.msra.mxu0 0.0
      %952 = vmatprep.subr.mxu0 0.0
      %953 = vmatpush1.msra.mxu0 0.0
      %954 = vmatprep.subr.mxu0 0.0
      %955 = vmatpush1.msra.mxu0 0.0
      %956 = vmatprep.subr.mxu0 0.0
      %957 = vmatpush1.msra.mxu0 0.0
      %958 = vmatprep.subr.mxu0 0.0
      %959 = vmatpush1.msra.mxu0 0.0
      %960 = vmatprep.subr.mxu0 0.0
      %961 = vmatpush1.msra.mxu0 0.0
      %962 = vmatprep.subr.mxu0 0.0
      %963 = vmatpush1.msra.mxu0 0.0
      %964 = vmatprep.subr.mxu0 0.0
      %965 = vmatpush1.msra.mxu0 0.0
      %966 = vmatprep.subr.mxu0 0.0
      %967 = vmatpush1.msra.mxu0 0.0
      %968 = vmatprep.subr.mxu0 0.0
      %969 = vmatpush1.msra.mxu0 0.0
      %970 = vmatprep.subr.mxu0 0.0
      %971 = vmatpush1.msra.mxu0 0.0
      %972 = vmatprep.subr.mxu0 0.0
      %973 = vmatpush1.msra.mxu0 0.0
      %974 = vmatprep.subr.mxu0 0.0
      %975 = vmatpush1.msra.mxu0 0.0
      %976 = vmatprep.subr.mxu0 0.0
      %977 = vmatpush1.msra.mxu0 0.0
      %978 = vmatprep.subr.mxu0 0.0
      %979 = vmatpush1.msra.mxu0 0.0
      %980 = vmatprep.subr.mxu0 0.0
      %981 = vmatpush1.msra.mxu0 0.0
      %982 = vmatprep.subr.mxu0 0.0
      %983 = vmatpush1.msra.mxu0 0.0
      %984 = vmatprep.subr.mxu0 0.0
      %985 = vmatpush1.msra.mxu0 0.0
      %986 = vmatprep.subr.mxu0 0.0
      %987 = vmatpush1.msra.mxu0 0.0
      %988 = vmatprep.mubr.f32.mxu0 0.0
      %989 = vmatmul.mubr.f32.gmra.mrb[0].mxu0 %v764
      %v990 = vpop.f32.mrb[0].mxu0
      %v991 = vadd.f32 %v680, %v990
      %v992 = vpop.f32.mrb[0].mxu0
      %v993 = vadd.f32 %v682, %v992
      %994 = vdwg.mxu0
      %995 = vmatprep.subr.mxu0 %v780
      %996 = vmatpush1.msra.mxu0 %v778
      %997 = vmatprep.subr.mxu0 0.0
      %998 = vmatpush1.msra.mxu0 0.0
      %999 = vmatprep.subr.mxu0 0.0
      %1000 = vmatpush1.msra.mxu0 0.0
      %1001 = vmatprep.subr.mxu0 0.0
      %1002 = vmatpush1.msra.mxu0 0.0
      %1003 = vmatprep.subr.mxu0 0.0
      %1004 = vmatpush1.msra.mxu0 0.0
      %1005 = vmatprep.subr.mxu0 0.0
      %1006 = vmatpush1.msra.mxu0 0.0
      %1007 = vmatprep.subr.mxu0 0.0
      %1008 = vmatpush1.msra.mxu0 0.0
      %1009 = vmatprep.subr.mxu0 0.0
      %1010 = vmatpush1.msra.mxu0 0.0
      %1011 = vmatprep.subr.mxu0 0.0
      %1012 = vmatpush1.msra.mxu0 0.0
      %1013 = vmatprep.subr.mxu0 0.0
      %1014 = vmatpush1.msra.mxu0 0.0
      %1015 = vmatprep.subr.mxu0 0.0
      %1016 = vmatpush1.msra.mxu0 0.0
      %1017 = vmatprep.subr.mxu0 0.0
      %1018 = vmatpush1.msra.mxu0 0.0
      %1019 = vmatprep.subr.mxu0 0.0
      %1020 = vmatpush1.msra.mxu0 0.0
      %1021 = vmatprep.subr.mxu0 0.0
      %1022 = vmatpush1.msra.mxu0 0.0
      %1023 = vmatprep.subr.mxu0 0.0
      %1024 = vmatpush1.msra.mxu0 0.0
      %1025 = vmatprep.subr.mxu0 0.0
      %1026 = vmatpush1.msra.mxu0 0.0
      %1027 = vmatprep.subr.mxu0 0.0
      %1028 = vmatpush1.msra.mxu0 0.0
      %1029 = vmatprep.subr.mxu0 0.0
      %1030 = vmatpush1.msra.mxu0 0.0
      %1031 = vmatprep.subr.mxu0 0.0
      %1032 = vmatpush1.msra.mxu0 0.0
      %1033 = vmatprep.subr.mxu0 0.0
      %1034 = vmatpush1.msra.mxu0 0.0
      %1035 = vmatprep.subr.mxu0 0.0
      %1036 = vmatpush1.msra.mxu0 0.0
      %1037 = vmatprep.subr.mxu0 0.0
      %1038 = vmatpush1.msra.mxu0 0.0
      %1039 = vmatprep.subr.mxu0 0.0
      %1040 = vmatpush1.msra.mxu0 0.0
      %1041 = vmatprep.subr.mxu0 0.0
      %1042 = vmatpush1.msra.mxu0 0.0
      %1043 = vmatprep.subr.mxu0 0.0
      %1044 = vmatpush1.msra.mxu0 0.0
      %1045 = vmatprep.subr.mxu0 0.0
      %1046 = vmatpush1.msra.mxu0 0.0
      %1047 = vmatprep.subr.mxu0 0.0
      %1048 = vmatpush1.msra.mxu0 0.0
      %1049 = vmatprep.subr.mxu0 0.0
      %1050 = vmatpush1.msra.mxu0 0.0
      %1051 = vmatprep.subr.mxu0 0.0
      %1052 = vmatpush1.msra.mxu0 0.0
      %1053 = vmatprep.subr.mxu0 0.0
      %1054 = vmatpush1.msra.mxu0 0.0
      %1055 = vmatprep.subr.mxu0 0.0
      %1056 = vmatpush1.msra.mxu0 0.0
      %1057 = vmatprep.subr.mxu0 0.0
      %1058 = vmatpush1.msra.mxu0 0.0
      %1059 = vmatprep.mubr.f32.mxu0 0.0
      %1060 = vmatmul.mubr.f32.gmra.mrb[0].mxu0 %v764
      %v1061 = vpop.f32.mrb[0].mxu0
      %v1062 = vadd.f32 %v751, %v1061
      %v1063 = vpop.f32.mrb[0].mxu0
      %v1064 = vadd.f32 %v753, %v1063
      %1065 = vdwg.mxu0
      %v1066 = vld [vmem:[%s4] sm:$0x3f]
      %1068 = vset.pattern.permute.xlu0 0
      %1069 = vperm.xlu0 %1068, %v1066
      %v1070 = vpop.permute.xlu0 %1069
      %v1072 = vadd.f32 %v849, %v1070
      %v1073 = vadd.f32 %v851, %v1070
      %v1074 = vadd.f32 %v920, %v1070
      %v1075 = vadd.f32 %v922, %v1070
      %v1076 = vadd.f32 %v991, %v1070
      %v1077 = vadd.f32 %v993, %v1070
      %v1078 = vadd.f32 %v1062, %v1070
      %v1079 = vadd.f32 %v1064, %v1070
      %v1080 = vld [vmem:[%s5] sm:$0xff]
      %v1081 = vld [vmem:[%s6] sm:$0xff]
      %v1083 = vsel %vm450, %v1081, 0
      %1085 = vmatprep.subr.mxu0 %v457
      %1086 = vmatpush1.msra.mxu0 %v455
      %1087 = vmatprep.subr.mxu0 0.0
      %1088 = vmatpush1.msra.mxu0 0.0
      %1089 = vmatprep.subr.mxu0 0.0
      %1090 = vmatpush1.msra.mxu0 0.0
      %1091 = vmatprep.subr.mxu0 0.0
      %1092 = vmatpush1.msra.mxu0 0.0
      %1093 = vmatprep.subr.mxu0 0.0
      %1094 = vmatpush1.msra.mxu0 0.0
      %1095 = vmatprep.subr.mxu0 0.0
      %1096 = vmatpush1.msra.mxu0 0.0
      %1097 = vmatprep.subr.mxu0 0.0
      %1098 = vmatpush1.msra.mxu0 0.0
      %1099 = vmatprep.subr.mxu0 0.0
      %1100 = vmatpush1.msra.mxu0 0.0
      %1101 = vmatprep.subr.mxu0 0.0
      %1102 = vmatpush1.msra.mxu0 0.0
      %1103 = vmatprep.subr.mxu0 0.0
      %1104 = vmatpush1.msra.mxu0 0.0
      %1105 = vmatprep.subr.mxu0 0.0
      %1106 = vmatpush1.msra.mxu0 0.0
      %1107 = vmatprep.subr.mxu0 0.0
      %1108 = vmatpush1.msra.mxu0 0.0
      %1109 = vmatprep.subr.mxu0 0.0
      %1110 = vmatpush1.msra.mxu0 0.0
      %1111 = vmatprep.subr.mxu0 0.0
      %1112 = vmatpush1.msra.mxu0 0.0
      %1113 = vmatprep.subr.mxu0 0.0
      %1114 = vmatpush1.msra.mxu0 0.0
      %1115 = vmatprep.subr.mxu0 0.0
      %1116 = vmatpush1.msra.mxu0 0.0
      %1117 = vmatprep.subr.mxu0 0.0
      %1118 = vmatpush1.msra.mxu0 0.0
      %1119 = vmatprep.subr.mxu0 0.0
      %1120 = vmatpush1.msra.mxu0 0.0
      %1121 = vmatprep.subr.mxu0 0.0
      %1122 = vmatpush1.msra.mxu0 0.0
      %1123 = vmatprep.subr.mxu0 0.0
      %1124 = vmatpush1.msra.mxu0 0.0
      %1125 = vmatprep.subr.mxu0 0.0
      %1126 = vmatpush1.msra.mxu0 0.0
      %1127 = vmatprep.subr.mxu0 0.0
      %1128 = vmatpush1.msra.mxu0 0.0
      %1129 = vmatprep.subr.mxu0 0.0
      %1130 = vmatpush1.msra.mxu0 0.0
      %1131 = vmatprep.subr.mxu0 0.0
      %1132 = vmatpush1.msra.mxu0 0.0
      %1133 = vmatprep.subr.mxu0 0.0
      %1134 = vmatpush1.msra.mxu0 0.0
      %1135 = vmatprep.subr.mxu0 0.0
      %1136 = vmatpush1.msra.mxu0 0.0
      %1137 = vmatprep.subr.mxu0 0.0
      %1138 = vmatpush1.msra.mxu0 0.0
      %1139 = vmatprep.subr.mxu0 0.0
      %1140 = vmatpush1.msra.mxu0 0.0
      %1141 = vmatprep.subr.mxu0 0.0
      %1142 = vmatpush1.msra.mxu0 0.0
      %1143 = vmatprep.subr.mxu0 0.0
      %1144 = vmatpush1.msra.mxu0 0.0
      %1145 = vmatprep.subr.mxu0 0.0
      %1146 = vmatpush1.msra.mxu0 0.0
      %1147 = vmatprep.subr.mxu0 0.0
      %1148 = vmatpush1.msra.mxu0 0.0
      %1149 = vmatprep.mubr.f32.mxu0 0.0
      %1150 = vmatmul.mubr.f32.gmra.mrb[0].mxu0 %v1083
      %v1151 = vpop.f32.mrb[0].mxu0
      %v1152 = vadd.f32 0.0, %v1151
      %v1153 = vpop.f32.mrb[0].mxu0
      %v1154 = vadd.f32 0.0, %v1153
      %1155 = vdwg.mxu0
      %1156 = vmatprep.subr.mxu0 %v461
      %1157 = vmatpush1.msra.mxu0 %v459
      %1158 = vmatprep.subr.mxu0 0.0
      %1159 = vmatpush1.msra.mxu0 0.0
      %1160 = vmatprep.subr.mxu0 0.0
      %1161 = vmatpush1.msra.mxu0 0.0
      %1162 = vmatprep.subr.mxu0 0.0
      %1163 = vmatpush1.msra.mxu0 0.0
      %1164 = vmatprep.subr.mxu0 0.0
      %1165 = vmatpush1.msra.mxu0 0.0
      %1166 = vmatprep.subr.mxu0 0.0
      %1167 = vmatpush1.msra.mxu0 0.0
      %1168 = vmatprep.subr.mxu0 0.0
      %1169 = vmatpush1.msra.mxu0 0.0
      %1170 = vmatprep.subr.mxu0 0.0
      %1171 = vmatpush1.msra.mxu0 0.0
      %1172 = vmatprep.subr.mxu0 0.0
      %1173 = vmatpush1.msra.mxu0 0.0
      %1174 = vmatprep.subr.mxu0 0.0
      %1175 = vmatpush1.msra.mxu0 0.0
      %1176 = vmatprep.subr.mxu0 0.0
      %1177 = vmatpush1.msra.mxu0 0.0
      %1178 = vmatprep.subr.mxu0 0.0
      %1179 = vmatpush1.msra.mxu0 0.0
      %1180 = vmatprep.subr.mxu0 0.0
      %1181 = vmatpush1.msra.mxu0 0.0
      %1182 = vmatprep.subr.mxu0 0.0
      %1183 = vmatpush1.msra.mxu0 0.0
      %1184 = vmatprep.subr.mxu0 0.0
      %1185 = vmatpush1.msra.mxu0 0.0
      %1186 = vmatprep.subr.mxu0 0.0
      %1187 = vmatpush1.msra.mxu0 0.0
      %1188 = vmatprep.subr.mxu0 0.0
      %1189 = vmatpush1.msra.mxu0 0.0
      %1190 = vmatprep.subr.mxu0 0.0
      %1191 = vmatpush1.msra.mxu0 0.0
      %1192 = vmatprep.subr.mxu0 0.0
      %1193 = vmatpush1.msra.mxu0 0.0
      %1194 = vmatprep.subr.mxu0 0.0
      %1195 = vmatpush1.msra.mxu0 0.0
      %1196 = vmatprep.subr.mxu0 0.0
      %1197 = vmatpush1.msra.mxu0 0.0
      %1198 = vmatprep.subr.mxu0 0.0
      %1199 = vmatpush1.msra.mxu0 0.0
      %1200 = vmatprep.subr.mxu0 0.0
      %1201 = vmatpush1.msra.mxu0 0.0
      %1202 = vmatprep.subr.mxu0 0.0
      %1203 = vmatpush1.msra.mxu0 0.0
      %1204 = vmatprep.subr.mxu0 0.0
      %1205 = vmatpush1.msra.mxu0 0.0
      %1206 = vmatprep.subr.mxu0 0.0
      %1207 = vmatpush1.msra.mxu0 0.0
      %1208 = vmatprep.subr.mxu0 0.0
      %1209 = vmatpush1.msra.mxu0 0.0
      %1210 = vmatprep.subr.mxu0 0.0
      %1211 = vmatpush1.msra.mxu0 0.0
      %1212 = vmatprep.subr.mxu0 0.0
      %1213 = vmatpush1.msra.mxu0 0.0
      %1214 = vmatprep.subr.mxu0 0.0
      %1215 = vmatpush1.msra.mxu0 0.0
      %1216 = vmatprep.subr.mxu0 0.0
      %1217 = vmatpush1.msra.mxu0 0.0
      %1218 = vmatprep.subr.mxu0 0.0
      %1219 = vmatpush1.msra.mxu0 0.0
      %1220 = vmatprep.mubr.f32.mxu0 0.0
      %1221 = vmatmul.mubr.f32.gmra.mrb[0].mxu0 %v1083
      %v1222 = vpop.f32.mrb[0].mxu0
      %v1223 = vadd.f32 0.0, %v1222
      %v1224 = vpop.f32.mrb[0].mxu0
      %v1225 = vadd.f32 0.0, %v1224
      %1226 = vdwg.mxu0
      %1227 = vmatprep.subr.mxu0 %v465
      %1228 = vmatpush1.msra.mxu0 %v463
      %1229 = vmatprep.subr.mxu0 0.0
      %1230 = vmatpush1.msra.mxu0 0.0
      %1231 = vmatprep.subr.mxu0 0.0
      %1232 = vmatpush1.msra.mxu0 0.0
      %1233 = vmatprep.subr.mxu0 0.0
      %1234 = vmatpush1.msra.mxu0 0.0
      %1235 = vmatprep.subr.mxu0 0.0
      %1236 = vmatpush1.msra.mxu0 0.0
      %1237 = vmatprep.subr.mxu0 0.0
      %1238 = vmatpush1.msra.mxu0 0.0
      %1239 = vmatprep.subr.mxu0 0.0
      %1240 = vmatpush1.msra.mxu0 0.0
      %1241 = vmatprep.subr.mxu0 0.0
      %1242 = vmatpush1.msra.mxu0 0.0
      %1243 = vmatprep.subr.mxu0 0.0
      %1244 = vmatpush1.msra.mxu0 0.0
      %1245 = vmatprep.subr.mxu0 0.0
      %1246 = vmatpush1.msra.mxu0 0.0
      %1247 = vmatprep.subr.mxu0 0.0
      %1248 = vmatpush1.msra.mxu0 0.0
      %1249 = vmatprep.subr.mxu0 0.0
      %1250 = vmatpush1.msra.mxu0 0.0
      %1251 = vmatprep.subr.mxu0 0.0
      %1252 = vmatpush1.msra.mxu0 0.0
      %1253 = vmatprep.subr.mxu0 0.0
      %1254 = vmatpush1.msra.mxu0 0.0
      %1255 = vmatprep.subr.mxu0 0.0
      %1256 = vmatpush1.msra.mxu0 0.0
      %1257 = vmatprep.subr.mxu0 0.0
      %1258 = vmatpush1.msra.mxu0 0.0
      %1259 = vmatprep.subr.mxu0 0.0
      %1260 = vmatpush1.msra.mxu0 0.0
      %1261 = vmatprep.subr.mxu0 0.0
      %1262 = vmatpush1.msra.mxu0 0.0
      %1263 = vmatprep.subr.mxu0 0.0
      %1264 = vmatpush1.msra.mxu0 0.0
      %1265 = vmatprep.subr.mxu0 0.0
      %1266 = vmatpush1.msra.mxu0 0.0
      %1267 = vmatprep.subr.mxu0 0.0
      %1268 = vmatpush1.msra.mxu0 0.0
      %1269 = vmatprep.subr.mxu0 0.0
      %1270 = vmatpush1.msra.mxu0 0.0
      %1271 = vmatprep.subr.mxu0 0.0
      %1272 = vmatpush1.msra.mxu0 0.0
      %1273 = vmatprep.subr.mxu0 0.0
      %1274 = vmatpush1.msra.mxu0 0.0
      %1275 = vmatprep.subr.mxu0 0.0
      %1276 = vmatpush1.msra.mxu0 0.0
      %1277 = vmatprep.subr.mxu0 0.0
      %1278 = vmatpush1.msra.mxu0 0.0
      %1279 = vmatprep.subr.mxu0 0.0
      %1280 = vmatpush1.msra.mxu0 0.0
      %1281 = vmatprep.subr.mxu0 0.0
      %1282 = vmatpush1.msra.mxu0 0.0
      %1283 = vmatprep.subr.mxu0 0.0
      %1284 = vmatpush1.msra.mxu0 0.0
      %1285 = vmatprep.subr.mxu0 0.0
      %1286 = vmatpush1.msra.mxu0 0.0
      %1287 = vmatprep.subr.mxu0 0.0
      %1288 = vmatpush1.msra.mxu0 0.0
      %1289 = vmatprep.subr.mxu0 0.0
      %1290 = vmatpush1.msra.mxu0 0.0
      %1291 = vmatprep.mubr.f32.mxu0 0.0
      %1292 = vmatmul.mubr.f32.gmra.mrb[0].mxu0 %v1083
      %v1293 = vpop.f32.mrb[0].mxu0
      %v1294 = vadd.f32 0.0, %v1293
      %v1295 = vpop.f32.mrb[0].mxu0
      %v1296 = vadd.f32 0.0, %v1295
      %1297 = vdwg.mxu0
      %1298 = vmatprep.subr.mxu0 %v469
      %1299 = vmatpush1.msra.mxu0 %v467
      %1300 = vmatprep.subr.mxu0 0.0
      %1301 = vmatpush1.msra.mxu0 0.0
      %1302 = vmatprep.subr.mxu0 0.0
      %1303 = vmatpush1.msra.mxu0 0.0
      %1304 = vmatprep.subr.mxu0 0.0
      %1305 = vmatpush1.msra.mxu0 0.0
      %1306 = vmatprep.subr.mxu0 0.0
      %1307 = vmatpush1.msra.mxu0 0.0
      %1308 = vmatprep.subr.mxu0 0.0
      %1309 = vmatpush1.msra.mxu0 0.0
      %1310 = vmatprep.subr.mxu0 0.0
      %1311 = vmatpush1.msra.mxu0 0.0
      %1312 = vmatprep.subr.mxu0 0.0
      %1313 = vmatpush1.msra.mxu0 0.0
      %1314 = vmatprep.subr.mxu0 0.0
      %1315 = vmatpush1.msra.mxu0 0.0
      %1316 = vmatprep.subr.mxu0 0.0
      %1317 = vmatpush1.msra.mxu0 0.0
      %1318 = vmatprep.subr.mxu0 0.0
      %1319 = vmatpush1.msra.mxu0 0.0
      %1320 = vmatprep.subr.mxu0 0.0
      %1321 = vmatpush1.msra.mxu0 0.0
      %1322 = vmatprep.subr.mxu0 0.0
      %1323 = vmatpush1.msra.mxu0 0.0
      %1324 = vmatprep.subr.mxu0 0.0
      %1325 = vmatpush1.msra.mxu0 0.0
      %1326 = vmatprep.subr.mxu0 0.0
      %1327 = vmatpush1.msra.mxu0 0.0
      %1328 = vmatprep.subr.mxu0 0.0
      %1329 = vmatpush1.msra.mxu0 0.0
      %1330 = vmatprep.subr.mxu0 0.0
      %1331 = vmatpush1.msra.mxu0 0.0
      %1332 = vmatprep.subr.mxu0 0.0
      %1333 = vmatpush1.msra.mxu0 0.0
      %1334 = vmatprep.subr.mxu0 0.0
      %1335 = vmatpush1.msra.mxu0 0.0
      %1336 = vmatprep.subr.mxu0 0.0
      %1337 = vmatpush1.msra.mxu0 0.0
      %1338 = vmatprep.subr.mxu0 0.0
      %1339 = vmatpush1.msra.mxu0 0.0
      %1340 = vmatprep.subr.mxu0 0.0
      %1341 = vmatpush1.msra.mxu0 0.0
      %1342 = vmatprep.subr.mxu0 0.0
      %1343 = vmatpush1.msra.mxu0 0.0
      %1344 = vmatprep.subr.mxu0 0.0
      %1345 = vmatpush1.msra.mxu0 0.0
      %1346 = vmatprep.subr.mxu0 0.0
      %1347 = vmatpush1.msra.mxu0 0.0
      %1348 = vmatprep.subr.mxu0 0.0
      %1349 = vmatpush1.msra.mxu0 0.0
      %1350 = vmatprep.subr.mxu0 0.0
      %1351 = vmatpush1.msra.mxu0 0.0
      %1352 = vmatprep.subr.mxu0 0.0
      %1353 = vmatpush1.msra.mxu0 0.0
      %1354 = vmatprep.subr.mxu0 0.0
      %1355 = vmatpush1.msra.mxu0 0.0
      %1356 = vmatprep.subr.mxu0 0.0
      %1357 = vmatpush1.msra.mxu0 0.0
      %1358 = vmatprep.subr.mxu0 0.0
      %1359 = vmatpush1.msra.mxu0 0.0
      %1360 = vmatprep.subr.mxu0 0.0
      %1361 = vmatpush1.msra.mxu0 0.0
      %1362 = vmatprep.mubr.f32.mxu0 0.0
      %1363 = vmatmul.mubr.f32.gmra.mrb[0].mxu0 %v1083
      %v1364 = vpop.f32.mrb[0].mxu0
      %v1365 = vadd.f32 0.0, %v1364
      %v1366 = vpop.f32.mrb[0].mxu0
      %v1367 = vadd.f32 0.0, %v1366
      %1368 = vdwg.mxu0
      %v1370 = vsel %vm450, %v1080, 0
      %1372 = vmatprep.subr.mxu0 %v768
      %1373 = vmatpush1.msra.mxu0 %v766
      %1374 = vmatprep.subr.mxu0 0.0
      %1375 = vmatpush1.msra.mxu0 0.0
      %1376 = vmatprep.subr.mxu0 0.0
      %1377 = vmatpush1.msra.mxu0 0.0
      %1378 = vmatprep.subr.mxu0 0.0
      %1379 = vmatpush1.msra.mxu0 0.0
      %1380 = vmatprep.subr.mxu0 0.0
      %1381 = vmatpush1.msra.mxu0 0.0
      %1382 = vmatprep.subr.mxu0 0.0
      %1383 = vmatpush1.msra.mxu0 0.0
      %1384 = vmatprep.subr.mxu0 0.0
      %1385 = vmatpush1.msra.mxu0 0.0
      %1386 = vmatprep.subr.mxu0 0.0
      %1387 = vmatpush1.msra.mxu0 0.0
      %1388 = vmatprep.subr.mxu0 0.0
      %1389 = vmatpush1.msra.mxu0 0.0
      %1390 = vmatprep.subr.mxu0 0.0
      %1391 = vmatpush1.msra.mxu0 0.0
      %1392 = vmatprep.subr.mxu0 0.0
      %1393 = vmatpush1.msra.mxu0 0.0
      %1394 = vmatprep.subr.mxu0 0.0
      %1395 = vmatpush1.msra.mxu0 0.0
      %1396 = vmatprep.subr.mxu0 0.0
      %1397 = vmatpush1.msra.mxu0 0.0
      %1398 = vmatprep.subr.mxu0 0.0
      %1399 = vmatpush1.msra.mxu0 0.0
      %1400 = vmatprep.subr.mxu0 0.0
      %1401 = vmatpush1.msra.mxu0 0.0
      %1402 = vmatprep.subr.mxu0 0.0
      %1403 = vmatpush1.msra.mxu0 0.0
      %1404 = vmatprep.subr.mxu0 0.0
      %1405 = vmatpush1.msra.mxu0 0.0
      %1406 = vmatprep.subr.mxu0 0.0
      %1407 = vmatpush1.msra.mxu0 0.0
      %1408 = vmatprep.subr.mxu0 0.0
      %1409 = vmatpush1.msra.mxu0 0.0
      %1410 = vmatprep.subr.mxu0 0.0
      %1411 = vmatpush1.msra.mxu0 0.0
      %1412 = vmatprep.subr.mxu0 0.0
      %1413 = vmatpush1.msra.mxu0 0.0
      %1414 = vmatprep.subr.mxu0 0.0
      %1415 = vmatpush1.msra.mxu0 0.0
      %1416 = vmatprep.subr.mxu0 0.0
      %1417 = vmatpush1.msra.mxu0 0.0
      %1418 = vmatprep.subr.mxu0 0.0
      %1419 = vmatpush1.msra.mxu0 0.0
      %1420 = vmatprep.subr.mxu0 0.0
      %1421 = vmatpush1.msra.mxu0 0.0
      %1422 = vmatprep.subr.mxu0 0.0
      %1423 = vmatpush1.msra.mxu0 0.0
      %1424 = vmatprep.subr.mxu0 0.0
      %1425 = vmatpush1.msra.mxu0 0.0
      %1426 = vmatprep.subr.mxu0 0.0
      %1427 = vmatpush1.msra.mxu0 0.0
      %1428 = vmatprep.subr.mxu0 0.0
      %1429 = vmatpush1.msra.mxu0 0.0
      %1430 = vmatprep.subr.mxu0 0.0
      %1431 = vmatpush1.msra.mxu0 0.0
      %1432 = vmatprep.subr.mxu0 0.0
      %1433 = vmatpush1.msra.mxu0 0.0
      %1434 = vmatprep.subr.mxu0 0.0
      %1435 = vmatpush1.msra.mxu0 0.0
      %1436 = vmatprep.mubr.f32.mxu0 0.0
      %1437 = vmatmul.mubr.f32.gmra.mrb[0].mxu0 %v1370
      %v1438 = vpop.f32.mrb[0].mxu0
      %v1439 = vadd.f32 %v1152, %v1438
      %v1440 = vpop.f32.mrb[0].mxu0
      %v1441 = vadd.f32 %v1154, %v1440
      %1442 = vdwg.mxu0
      %1443 = vmatprep.subr.mxu0 %v772
      %1444 = vmatpush1.msra.mxu0 %v770
      %1445 = vmatprep.subr.mxu0 0.0
      %1446 = vmatpush1.msra.mxu0 0.0
      %1447 = vmatprep.subr.mxu0 0.0
      %1448 = vmatpush1.msra.mxu0 0.0
      %1449 = vmatprep.subr.mxu0 0.0
      %1450 = vmatpush1.msra.mxu0 0.0
      %1451 = vmatprep.subr.mxu0 0.0
      %1452 = vmatpush1.msra.mxu0 0.0
      %1453 = vmatprep.subr.mxu0 0.0
      %1454 = vmatpush1.msra.mxu0 0.0
      %1455 = vmatprep.subr.mxu0 0.0
      %1456 = vmatpush1.msra.mxu0 0.0
      %1457 = vmatprep.subr.mxu0 0.0
      %1458 = vmatpush1.msra.mxu0 0.0
      %1459 = vmatprep.subr.mxu0 0.0
      %1460 = vmatpush1.msra.mxu0 0.0
      %1461 = vmatprep.subr.mxu0 0.0
      %1462 = vmatpush1.msra.mxu0 0.0
      %1463 = vmatprep.subr.mxu0 0.0
      %1464 = vmatpush1.msra.mxu0 0.0
      %1465 = vmatprep.subr.mxu0 0.0
      %1466 = vmatpush1.msra.mxu0 0.0
      %1467 = vmatprep.subr.mxu0 0.0
      %1468 = vmatpush1.msra.mxu0 0.0
      %1469 = vmatprep.subr.mxu0 0.0
      %1470 = vmatpush1.msra.mxu0 0.0
      %1471 = vmatprep.subr.mxu0 0.0
      %1472 = vmatpush1.msra.mxu0 0.0
      %1473 = vmatprep.subr.mxu0 0.0
      %1474 = vmatpush1.msra.mxu0 0.0
      %1475 = vmatprep.subr.mxu0 0.0
      %1476 = vmatpush1.msra.mxu0 0.0
      %1477 = vmatprep.subr.mxu0 0.0
      %1478 = vmatpush1.msra.mxu0 0.0
      %1479 = vmatprep.subr.mxu0 0.0
      %1480 = vmatpush1.msra.mxu0 0.0
      %1481 = vmatprep.subr.mxu0 0.0
      %1482 = vmatpush1.msra.mxu0 0.0
      %1483 = vmatprep.subr.mxu0 0.0
      %1484 = vmatpush1.msra.mxu0 0.0
      %1485 = vmatprep.subr.mxu0 0.0
      %1486 = vmatpush1.msra.mxu0 0.0
      %1487 = vmatprep.subr.mxu0 0.0
      %1488 = vmatpush1.msra.mxu0 0.0
      %1489 = vmatprep.subr.mxu0 0.0
      %1490 = vmatpush1.msra.mxu0 0.0
      %1491 = vmatprep.subr.mxu0 0.0
      %1492 = vmatpush1.msra.mxu0 0.0
      %1493 = vmatprep.subr.mxu0 0.0
      %1494 = vmatpush1.msra.mxu0 0.0
      %1495 = vmatprep.subr.mxu0 0.0
      %1496 = vmatpush1.msra.mxu0 0.0
      %1497 = vmatprep.subr.mxu0 0.0
      %1498 = vmatpush1.msra.mxu0 0.0
      %1499 = vmatprep.subr.mxu0 0.0
      %1500 = vmatpush1.msra.mxu0 0.0
      %1501 = vmatprep.subr.mxu0 0.0
      %1502 = vmatpush1.msra.mxu0 0.0
      %1503 = vmatprep.subr.mxu0 0.0
      %1504 = vmatpush1.msra.mxu0 0.0
      %1505 = vmatprep.subr.mxu0 0.0
      %1506 = vmatpush1.msra.mxu0 0.0
      %1507 = vmatprep.mubr.f32.mxu0 0.0
      %1508 = vmatmul.mubr.f32.gmra.mrb[0].mxu0 %v1370
      %v1509 = vpop.f32.mrb[0].mxu0
      %v1510 = vadd.f32 %v1223, %v1509
      %v1511 = vpop.f32.mrb[0].mxu0
      %v1512 = vadd.f32 %v1225, %v1511
      %1513 = vdwg.mxu0
      %1514 = vmatprep.subr.mxu0 %v776
      %1515 = vmatpush1.msra.mxu0 %v774
      %1516 = vmatprep.subr.mxu0 0.0
      %1517 = vmatpush1.msra.mxu0 0.0
      %1518 = vmatprep.subr.mxu0 0.0
      %1519 = vmatpush1.msra.mxu0 0.0
      %1520 = vmatprep.subr.mxu0 0.0
      %1521 = vmatpush1.msra.mxu0 0.0
      %1522 = vmatprep.subr.mxu0 0.0
      %1523 = vmatpush1.msra.mxu0 0.0
      %1524 = vmatprep.subr.mxu0 0.0
      %1525 = vmatpush1.msra.mxu0 0.0
      %1526 = vmatprep.subr.mxu0 0.0
      %1527 = vmatpush1.msra.mxu0 0.0
      %1528 = vmatprep.subr.mxu0 0.0
      %1529 = vmatpush1.msra.mxu0 0.0
      %1530 = vmatprep.subr.mxu0 0.0
      %1531 = vmatpush1.msra.mxu0 0.0
      %1532 = vmatprep.subr.mxu0 0.0
      %1533 = vmatpush1.msra.mxu0 0.0
      %1534 = vmatprep.subr.mxu0 0.0
      %1535 = vmatpush1.msra.mxu0 0.0
      %1536 = vmatprep.subr.mxu0 0.0
      %1537 = vmatpush1.msra.mxu0 0.0
      %1538 = vmatprep.subr.mxu0 0.0
      %1539 = vmatpush1.msra.mxu0 0.0
      %1540 = vmatprep.subr.mxu0 0.0
      %1541 = vmatpush1.msra.mxu0 0.0
      %1542 = vmatprep.subr.mxu0 0.0
      %1543 = vmatpush1.msra.mxu0 0.0
      %1544 = vmatprep.subr.mxu0 0.0
      %1545 = vmatpush1.msra.mxu0 0.0
      %1546 = vmatprep.subr.mxu0 0.0
      %1547 = vmatpush1.msra.mxu0 0.0
      %1548 = vmatprep.subr.mxu0 0.0
      %1549 = vmatpush1.msra.mxu0 0.0
      %1550 = vmatprep.subr.mxu0 0.0
      %1551 = vmatpush1.msra.mxu0 0.0
      %1552 = vmatprep.subr.mxu0 0.0
      %1553 = vmatpush1.msra.mxu0 0.0
      %1554 = vmatprep.subr.mxu0 0.0
      %1555 = vmatpush1.msra.mxu0 0.0
      %1556 = vmatprep.subr.mxu0 0.0
      %1557 = vmatpush1.msra.mxu0 0.0
      %1558 = vmatprep.subr.mxu0 0.0
      %1559 = vmatpush1.msra.mxu0 0.0
      %1560 = vmatprep.subr.mxu0 0.0
      %1561 = vmatpush1.msra.mxu0 0.0
      %1562 = vmatprep.subr.mxu0 0.0
      %1563 = vmatpush1.msra.mxu0 0.0
      %1564 = vmatprep.subr.mxu0 0.0
      %1565 = vmatpush1.msra.mxu0 0.0
      %1566 = vmatprep.subr.mxu0 0.0
      %1567 = vmatpush1.msra.mxu0 0.0
      %1568 = vmatprep.subr.mxu0 0.0
      %1569 = vmatpush1.msra.mxu0 0.0
      %1570 = vmatprep.subr.mxu0 0.0
      %1571 = vmatpush1.msra.mxu0 0.0
      %1572 = vmatprep.subr.mxu0 0.0
      %1573 = vmatpush1.msra.mxu0 0.0
      %1574 = vmatprep.subr.mxu0 0.0
      %1575 = vmatpush1.msra.mxu0 0.0
      %1576 = vmatprep.subr.mxu0 0.0
      %1577 = vmatpush1.msra.mxu0 0.0
      %1578 = vmatprep.mubr.f32.mxu0 0.0
      %1579 = vmatmul.mubr.f32.gmra.mrb[0].mxu0 %v1370
      %v1580 = vpop.f32.mrb[0].mxu0
      %v1581 = vadd.f32 %v1294, %v1580
      %v1582 = vpop.f32.mrb[0].mxu0
      %v1583 = vadd.f32 %v1296, %v1582
      %1584 = vdwg.mxu0
      %1585 = vmatprep.subr.mxu0 %v780
      %1586 = vmatpush1.msra.mxu0 %v778
      %1587 = vmatprep.subr.mxu0 0.0
      %1588 = vmatpush1.msra.mxu0 0.0
      %1589 = vmatprep.subr.mxu0 0.0
      %1590 = vmatpush1.msra.mxu0 0.0
      %1591 = vmatprep.subr.mxu0 0.0
      %1592 = vmatpush1.msra.mxu0 0.0
      %1593 = vmatprep.subr.mxu0 0.0
      %1594 = vmatpush1.msra.mxu0 0.0
      %1595 = vmatprep.subr.mxu0 0.0
      %1596 = vmatpush1.msra.mxu0 0.0
      %1597 = vmatprep.subr.mxu0 0.0
      %1598 = vmatpush1.msra.mxu0 0.0
      %1599 = vmatprep.subr.mxu0 0.0
      %1600 = vmatpush1.msra.mxu0 0.0
      %1601 = vmatprep.subr.mxu0 0.0
      %1602 = vmatpush1.msra.mxu0 0.0
      %1603 = vmatprep.subr.mxu0 0.0
      %1604 = vmatpush1.msra.mxu0 0.0
      %1605 = vmatprep.subr.mxu0 0.0
      %1606 = vmatpush1.msra.mxu0 0.0
      %1607 = vmatprep.subr.mxu0 0.0
      %1608 = vmatpush1.msra.mxu0 0.0
      %1609 = vmatprep.subr.mxu0 0.0
      %1610 = vmatpush1.msra.mxu0 0.0
      %1611 = vmatprep.subr.mxu0 0.0
      %1612 = vmatpush1.msra.mxu0 0.0
      %1613 = vmatprep.subr.mxu0 0.0
      %1614 = vmatpush1.msra.mxu0 0.0
      %1615 = vmatprep.subr.mxu0 0.0
      %1616 = vmatpush1.msra.mxu0 0.0
      %1617 = vmatprep.subr.mxu0 0.0
      %1618 = vmatpush1.msra.mxu0 0.0
      %1619 = vmatprep.subr.mxu0 0.0
      %1620 = vmatpush1.msra.mxu0 0.0
      %1621 = vmatprep.subr.mxu0 0.0
      %1622 = vmatpush1.msra.mxu0 0.0
      %1623 = vmatprep.subr.mxu0 0.0
      %1624 = vmatpush1.msra.mxu0 0.0
      %1625 = vmatprep.subr.mxu0 0.0
      %1626 = vmatpush1.msra.mxu0 0.0
      %1627 = vmatprep.subr.mxu0 0.0
      %1628 = vmatpush1.msra.mxu0 0.0
      %1629 = vmatprep.subr.mxu0 0.0
      %1630 = vmatpush1.msra.mxu0 0.0
      %1631 = vmatprep.subr.mxu0 0.0
      %1632 = vmatpush1.msra.mxu0 0.0
      %1633 = vmatprep.subr.mxu0 0.0
      %1634 = vmatpush1.msra.mxu0 0.0
      %1635 = vmatprep.subr.mxu0 0.0
      %1636 = vmatpush1.msra.mxu0 0.0
      %1637 = vmatprep.subr.mxu0 0.0
      %1638 = vmatpush1.msra.mxu0 0.0
      %1639 = vmatprep.subr.mxu0 0.0
      %1640 = vmatpush1.msra.mxu0 0.0
      %1641 = vmatprep.subr.mxu0 0.0
      %1642 = vmatpush1.msra.mxu0 0.0
      %1643 = vmatprep.subr.mxu0 0.0
      %1644 = vmatpush1.msra.mxu0 0.0
      %1645 = vmatprep.subr.mxu0 0.0
      %1646 = vmatpush1.msra.mxu0 0.0
      %1647 = vmatprep.subr.mxu0 0.0
      %1648 = vmatpush1.msra.mxu0 0.0
      %1649 = vmatprep.mubr.f32.mxu0 0.0
      %1650 = vmatmul.mubr.f32.gmra.mrb[0].mxu0 %v1370
      %v1651 = vpop.f32.mrb[0].mxu0
      %v1652 = vadd.f32 %v1365, %v1651
      %v1653 = vpop.f32.mrb[0].mxu0
      %v1654 = vadd.f32 %v1367, %v1653
      %1655 = vdwg.mxu0
      %v1656 = vld [vmem:[%s7] sm:$0xff]
      %1658 = vset.pattern.permute.xlu0 0
      %1659 = vperm.xlu0 %1658, %v1656
      %v1660 = vpop.permute.xlu0 %1659
      %v1662 = vadd.f32 %v1439, %v1660
      %v1663 = vadd.f32 %v1441, %v1660
      %v1664 = vadd.f32 %v1510, %v1660
      %v1665 = vadd.f32 %v1512, %v1660
      %v1666 = vadd.f32 %v1581, %v1660
      %v1667 = vadd.f32 %v1583, %v1660
      %v1668 = vadd.f32 %v1652, %v1660
      %v1669 = vadd.f32 %v1654, %v1660
      %1670 = vst [vmem:[%s420] sm:$0x3f] %v1072
      %1671 = vst [vmem:[%s420 + $0x8] sm:$0x3f] %v1073
      %1672 = vst [vmem:[%s420 + $0x10] sm:$0x3f] %v1074
      %1673 = vst [vmem:[%s420 + $0x18] sm:$0x3f] %v1075
      %1674 = vst [vmem:[%s420 + $0x20] sm:$0x3f] %v1076
      %1675 = vst [vmem:[%s420 + $0x28] sm:$0x3f] %v1077
      %1676 = vst [vmem:[%s420 + $0x30] sm:$0x3f] %v1078
      %1677 = vst [vmem:[%s420 + $0x38] sm:$0x3f] %v1079
      %1678 = vst [vmem:[%s430] sm:$0xff] %v1662
      %1679 = vst [vmem:[%s430 + $0x8] sm:$0xff] %v1663
      %1680 = vst [vmem:[%s430 + $0x10] sm:$0xff] %v1664
      %1681 = vst [vmem:[%s430 + $0x18] sm:$0xff] %v1665
      %1682 = vst [vmem:[%s430 + $0x20] sm:$0xff] %v1666
      %1683 = vst [vmem:[%s430 + $0x28] sm:$0xff] %v1667
      %1684 = vst [vmem:[%s430 + $0x30] sm:$0xff] %v1668
      %1685 = vst [vmem:[%s430 + $0x38] sm:$0xff] %v1669
      %s1686 = smul.u32 8, %s26
      %p1687 = scmp.lt.s32.totalorder %s25, 1
      %s1688 = scalar_select %p1687, %s25, 1
      %p1689 = scmp.lt.s32.totalorder %s1686, 7
      %s1690 = scalar_select %p1689, %s1686, 7
      %s1691 = smul.addr %s1688, 8
      %s1692 = sadd.s32 %s1690, %s1691
      %s1693 = smul.addr %s1692, 8
      %s1694 = scalar_lea.vmem %s8, %s1693
      %s1695 = smul.u32 8, %s26
      %p1696 = scmp.lt.s32.totalorder %s25, 1
      %s1697 = scalar_select %p1696, %s25, 1
      %p1698 = scmp.lt.s32.totalorder %s1695, 7
      %s1699 = scalar_select %p1698, %s1695, 7
      %s1700 = smul.addr %s1697, 8
      %s1701 = sadd.s32 %s1699, %s1700
      %s1702 = smul.addr %s1701, 8
      %s1703 = scalar_lea.vmem %s9, %s1702
      // Predicated region
      $region53: #{ensemble_forward.2} parent=51 // pred_check
        %p1704 = pneg %p235
      $region54: #{ensemble_forward.2} parent=51 // pred_check_branch
        %1706 = sbr.rel (%p1704) target = $region56
      $region55: #{ensemble_forward.2} parent=51 // pred_region
        %s1707 = smul.u32 8, %s26
      $region56: #{ensemble_forward.2} parent=51 // pred_fallthru
        _
      // Predicated region
      $region57: #{ensemble_forward.2} parent=51 // pred_check
        %p1708 = pneg %p263
      $region58: #{ensemble_forward.2} parent=51 // pred_check_branch
        %1710 = sbr.rel (%p1708) target = $region60
      $region59: #{ensemble_forward.2} parent=51 // pred_region
        %s1711 = smul.u32 8, %s26
      $region60: #{ensemble_forward.2} parent=51 // pred_fallthru
        _
    $region52: #{ensemble_forward.2} parent=5 // pred_fallthru
      _
    %p1712 = scmp.le.s32.totalorder 2, %s16
    // Predicated region
    $region61: #{ensemble_forward.2} parent=5 // pred_check
      %p1713 = pneg %p1712
    $region62: #{ensemble_forward.2} parent=5 // pred_check_branch
      %1715 = sbr.rel (%p1713) target = $region64
    $region63: #{ensemble_forward.2} parent=5 // pred_region
      %s1716 = ssub.s32 %s16, 2
      // Predicated region
      $region65: #{ensemble_forward.2} parent=63 // pred_check
        %p1717 = pneg %p241
      $region66: #{ensemble_forward.2} parent=63 // pred_check_branch
        %1719 = sbr.rel (%p1717) target = $region68
      $region67: #{ensemble_forward.2} parent=63 // pred_region
        %s1720 = smul.u32 8, %s28
        %p1721 = scmp.lt.s32.totalorder %s27, 1
        %s1722 = scalar_select %p1721, %s27, 1
        %p1723 = scmp.lt.s32.totalorder %s1720, 7
        %s1724 = scalar_select %p1723, %s1720, 7
        %s1725 = smul.addr %s1722, 8
        %s1726 = sadd.s32 %s1724, %s1725
        %s1727 = smul.addr %s1726, 8
        %s1728 = scalar_lea.vmem %s8, %s1727
      $region68: #{ensemble_forward.2} parent=63 // pred_fallthru
        _
      // Predicated region
      $region69: #{ensemble_forward.2} parent=63 // pred_check
        %p1729 = pneg %p269
      $region70: #{ensemble_forward.2} parent=63 // pred_check_branch
        %1731 = sbr.rel (%p1729) target = $region72
      $region71: #{ensemble_forward.2} parent=63 // pred_region
        %s1732 = smul.u32 8, %s28
        %p1733 = scmp.lt.s32.totalorder %s27, 1
        %s1734 = scalar_select %p1733, %s27, 1
        %p1735 = scmp.lt.s32.totalorder %s1732, 7
        %s1736 = scalar_select %p1735, %s1732, 7
        %s1737 = smul.addr %s1734, 8
        %s1738 = sadd.s32 %s1736, %s1737
        %s1739 = smul.addr %s1738, 8
        %s1740 = scalar_lea.vmem %s9, %s1739
      $region72: #{ensemble_forward.2} parent=63 // pred_fallthru
        _
    $region64: #{ensemble_forward.2} parent=5 // pred_fallthru
      _
  $region6: #{ensemble_forward.2} parent=0 // loop_footer
    %s20 = sadd.s32 1, %s16
  $region7: #{ensemble_forward.2} parent=0 // loop_footer_branch
    %15 = sbr.rel target = $region3
  $region8: #{ensemble_forward.2} parent=0 // loop_exit
    _

</llo_original>
